<compile_context>
chip_gen: v7x
topology: tpu7x:2x2x1
jax: 0.10.0
libtpu: 0.0.40
codegen_flags: <defaults>
</compile_context>

<pallas_src>
import jax
import jax.numpy as jnp
from jax import lax
from jax.experimental import pallas as pl
from jax.experimental.pallas import tpu as pltpu


# ----------------------------------------------------------------------------
# Helpers
# ----------------------------------------------------------------------------
def _prefix_sum_time(v):
    """Cumulative sum along axis 0 (time) of a (S, Bt, 1) value.

    S is small & static, so an unrolled running add (pure VPU work) replaces
    the (S, S) lower-triangular matmul used previously.
    """
    parts = [v[0]]
    for s in range(1, v.shape[0]):
        parts.append(parts[-1] + v[s])
    return jnp.stack(parts, axis=0)


# ----------------------------------------------------------------------------
# Pallas kernel: one batch block (Bt samples) per grid step, time-major.
# ----------------------------------------------------------------------------
def global_selector_kernel(
    # scalar prefetch (SMEM)
    bias_ref,                  # (4,) f32: [b_a1, b_sp, b_a2, b_tp]
    # inputs (VMEM blocks)
    x_ref,                     # (S, Bt, D)  time-major frame-pair features
    w_a1_ref,                  # (D, 1)      attention_linear1
    w_spx_ref, w_spg_ref,      # (D, 1) x2   spatial_linear split (x-part, global-part)
    w_a2_ref,                  # (D, 1)      attention_linear2
    w_tpx_ref, w_tpg_ref,      # (D, 1) x2   temporal_linear split
    w_ih_ref, w_hh_ref,        # (D, 4D) x2  LSTM weights (gate order i, f, g, o)
    b_gates_ref,               # (1, 4D)     b_ih + b_hh folded
    w_cls_ref, b_cls_ref,      # (D, Cp), (1, Cp)  classifier (lane-padded)
    # outputs
    out_ref,                   # (S, Bt, Cp)
    # scratch
    gx_s,                      # (S, Bt, 4D) f32  hoisted LSTM input projection
    h_s,                       # (S, Bt, D)  f32  LSTM hidden states
):
    S, Bt, D = x_ref.shape
    b_a1 = bias_ref[0]
    b_sp = bias_ref[1]
    b_a2 = bias_ref[2]
    b_tp = bias_ref[3]

    x = x_ref[...].astype(jnp.float32)                         # (S, Bt, D)
    x2 = x.reshape(S * Bt, D)

    # ---- frame attention 1 (sigmoid) -> global_x1 (per sample) --------------
    alpha = jax.nn.sigmoid(
        jnp.dot(x2, w_a1_ref[...], preferred_element_type=jnp.float32) + b_a1
    ).reshape(S, Bt, 1)
    gx1 = jnp.sum(x * alpha, axis=0) / jnp.sum(alpha, axis=0)   # (Bt, D)

    # ---- spatial gate beta + cumulative sum over time ------------------------
    beta_x = jnp.dot(x2, w_spx_ref[...], preferred_element_type=jnp.float32)
    beta_g = jnp.dot(gx1, w_spg_ref[...], preferred_element_type=jnp.float32)
    beta = jax.nn.sigmoid(beta_x.reshape(S, Bt, 1) + beta_g[None] + b_sp)
    omega = x * _prefix_sum_time(beta)                          # (S, Bt, D)
    omega2 = omega.reshape(S * Bt, D)

    # ---- LSTM: input projection hoisted out of the recurrence ----------------
    gx_s[...] = (jnp.dot(omega2, w_ih_ref[...],
                         preferred_element_type=jnp.float32)
                 + b_gates_ref[...]).reshape(S, Bt, 4 * D)
    w_hh = w_hh_ref[...]

    def lstm_step(t, carry):
        h, c = carry                                            # (Bt, D) each
        g = gx_s[t] + jnp.dot(h, w_hh, preferred_element_type=jnp.float32)
        # full-width activations first (2 EUP ops on the whole 4D-wide tile),
        # then static lane slices for the gate combine.
        sg = jax.nn.sigmoid(g)
        tg = jnp.tanh(g)
        i_g = sg[:, 0:D]
        f_g = sg[:, D:2 * D]
        g_g = tg[:, 2 * D:3 * D]
        o_g = sg[:, 3 * D:4 * D]
        c_new = f_g * c + i_g * g_g
        h_new = o_g * jnp.tanh(c_new)
        h_s[t] = h_new
        return h_new, c_new

    carry = (jnp.zeros((Bt, D), jnp.float32),
             jnp.zeros((Bt, D), jnp.float32))
    if S <= 32:
        # full unroll: short static trip count, recurrence fully visible to
        # the scheduler.
        for t in range(S):
            carry = lstm_step(t, carry)
    else:
        carry = lax.fori_loop(0, S, lstm_step, carry)

    h_all = h_s[...]                                            # (S, Bt, D)
    h2 = h_all.reshape(S * Bt, D)

    # ---- frame attention 2 (softmax over time) -> global_x2 ------------------
    lam_logit = (jnp.dot(h2, w_a2_ref[...], preferred_element_type=jnp.float32)
                 + b_a2).reshape(S, Bt, 1)
    lam = jnp.exp(lam_logit - jnp.max(lam_logit, axis=0, keepdims=True))
    lam = lam / jnp.sum(lam, axis=0, keepdims=True)
    gx2 = jnp.sum(omega * lam, axis=0)                          # (Bt, D); lam already normalized

    # ---- temporal gate gamma + cumulative sum over time ----------------------
    gam_x = jnp.dot(omega2, w_tpx_ref[...], preferred_element_type=jnp.float32)
    gam_g = jnp.dot(gx2, w_tpg_ref[...], preferred_element_type=jnp.float32)
    gamma = jax.nn.sigmoid(gam_x.reshape(S, Bt, 1) + gam_g[None] + b_tp)
    c_feat = h_all * _prefix_sum_time(gamma)                    # (S, Bt, D)

    # ---- classifier (lane-dense padded output) --------------------------------
    out = (jnp.dot(c_feat.reshape(S * Bt, D), w_cls_ref[...],
                   preferred_element_type=jnp.float32) + b_cls_ref[...])
    out_ref[...] = out.reshape(S, Bt, out_ref.shape[-1]).astype(out_ref.dtype)


# ----------------------------------------------------------------------------
# Wrapper
# ----------------------------------------------------------------------------
def global_selector_forward(x_pairs, p, *, block_b=8):
    """x_pairs: (B, S, D) frame-pair features; returns (B, S, C)."""
    B, S, D = x_pairs.shape
    C = p["w_cls"].shape[1]
    Cp = pl.cdiv(C, 128) * 128             # lane-dense classifier width
    Bt = max(8, (block_b // 8) * 8)        # batch block: multiple of 8 sublanes
    Bp = pl.cdiv(B, Bt) * Bt

    # time-major layout + batch padding (padding rows are zeros; sliced below)
    x_t = jnp.transpose(x_pairs, (1, 0, 2)).astype(jnp.float32)   # (S, B, D)
    if Bp != B:
        x_t = jnp.pad(x_t, ((0, 0), (0, Bp - B), (0, 0)))

    # parameter plumbing (host-side XLA ops)
    w_spx, w_spg = p["w_sp"][:D], p["w_sp"][D:]
    w_tpx, w_tpg = p["w_tp"][:D], p["w_tp"][D:]
    b_gates = p["b_ih"] + p["b_hh"]                               # (1, 4D)
    w_cls = jnp.pad(p["w_cls"], ((0, 0), (0, Cp - C)))
    b_cls = jnp.pad(p["b_cls"], ((0, 0), (0, Cp - C)))
    bias_sc = jnp.concatenate([p["b_a1"].reshape(-1), p["b_sp"].reshape(-1),
                               p["b_a2"].reshape(-1), p["b_tp"].reshape(-1)])

    def wspec(shape):
        n = len(shape)

        def imap(b, s):
            return (0,) * n

        return pl.BlockSpec(shape, imap)

    in_specs = [
        pl.BlockSpec((S, Bt, D), lambda b, s: (0, b, 0)),         # x (time-major)
        wspec((D, 1)),                                            # w_a1
        wspec((D, 1)), wspec((D, 1)),                             # w_spx, w_spg
        wspec((D, 1)),                                            # w_a2
        wspec((D, 1)), wspec((D, 1)),                             # w_tpx, w_tpg
        wspec((D, 4 * D)), wspec((D, 4 * D)), wspec((1, 4 * D)),  # w_ih, w_hh, b_gates
        wspec((D, Cp)), wspec((1, Cp)),                           # w_cls, b_cls
    ]
    out_specs = pl.BlockSpec((S, Bt, Cp), lambda b, s: (0, b, 0))

    out_t = pl.pallas_call(
        global_selector_kernel,
        out_shape=jax.ShapeDtypeStruct((S, Bp, Cp), jnp.float32),
        grid_spec=pltpu.PrefetchScalarGridSpec(
            num_scalar_prefetch=1,
            grid=(Bp // Bt,),
            in_specs=in_specs,
            out_specs=out_specs,
            scratch_shapes=[pltpu.VMEM((S, Bt, 4 * D), jnp.float32),
                            pltpu.VMEM((S, Bt, D), jnp.float32)],
        ),
        compiler_params=pltpu.CompilerParams(
            dimension_semantics=("parallel",)),
    )(bias_sc, x_t,
      p["w_a1"], w_spx, w_spg,
      p["w_a2"], w_tpx, w_tpg,
      p["w_ih"], p["w_hh"], b_gates,
      w_cls, b_cls)

    return jnp.transpose(out_t[:, :B, :C], (1, 0, 2))             # (B, S, C)


# ----------------------------------------------------------------------------
# Glue (plain JAX): frame-pair generation + pure-JAX reference for checking.
# ----------------------------------------------------------------------------
def generate_frame_pairs(x):
    # pair each frame with the following frame (last paired with itself)
    nxt = jnp.concatenate([x[:, 1:], x[:, -1:]], axis=1)
    return jnp.concatenate([x, nxt], axis=-1)


def reference_forward(x_pairs, p):
    B, S, D = x_pairs.shape
    x = x_pairs
    alpha = jax.nn.sigmoid(x @ p["w_a1"] + p["b_a1"])                  # (B,S,1)
    gx1 = jnp.sum(x * alpha, axis=1) / jnp.sum(alpha, axis=1)          # (B,D)
    beta = jax.nn.sigmoid(
        x @ p["w_sp"][:D] + (gx1 @ p["w_sp"][D:])[:, None, :] + p["b_sp"])
    omega = x * jnp.cumsum(beta, axis=1)

    def cell(carry, xt):
        h, c = carry
        gates = xt @ p["w_ih"] + p["b_ih"][0] + h @ p["w_hh"] + p["b_hh"][0]
        i = jax.nn.sigmoid(gates[:, 0:D])
        f = jax.nn.sigmoid(gates[:, D:2 * D])
        g = jnp.tanh(gates[:, 2 * D:3 * D])
        o = jax.nn.sigmoid(gates[:, 3 * D:4 * D])
        c_new = f * c + i * g
        h_new = o * jnp.tanh(c_new)
        return (h_new, c_new), h_new

    h0 = jnp.zeros((B, D), jnp.float32)
    c0 = jnp.zeros((B, D), jnp.float32)
    _, h_seq = lax.scan(cell, (h0, c0), jnp.swapaxes(omega, 0, 1))
    h = jnp.swapaxes(h_seq, 0, 1)                                       # (B,S,D)

    lam = jax.nn.softmax(h @ p["w_a2"] + p["b_a2"], axis=1)             # (B,S,1)
    gx2 = jnp.sum(omega * lam, axis=1) / jnp.sum(lam, axis=1)           # (B,D)
    gamma = jax.nn.sigmoid(
        omega @ p["w_tp"][:D] + (gx2 @ p["w_tp"][D:])[:, None, :] + p["b_tp"])
    c_feat = h * jnp.cumsum(gamma, axis=1)
    return c_feat @ p["w_cls"] + p["b_cls"]


def make_params(key, num_features, num_classes):
    D = 2 * num_features
    keys = jax.random.split(key, 14)
    s = 0.1
    p = {
        "w_a1": s * jax.random.normal(keys[0], (D, 1), jnp.float32),
        "b_a1": 0.01 * jnp.ones((1, 1), jnp.float32),
        "w_sp": s * jax.random.normal(keys[1], (2 * D, 1), jnp.float32),
        "b_sp": 0.01 * jnp.ones((1, 1), jnp.float32),
        "w_a2": s * jax.random.normal(keys[2], (D, 1), jnp.float32),
        "b_a2": 0.01 * jnp.ones((1, 1), jnp.float32),
        "w_tp": s * jax.random.normal(keys[3], (2 * D, 1), jnp.float32),
        "b_tp": 0.01 * jnp.ones((1, 1), jnp.float32),
        "w_ih": s * jax.random.normal(keys[4], (D, 4 * D), jnp.float32),
        "b_ih": 0.01 * jax.random.normal(keys[5], (1, 4 * D), jnp.float32),
        "w_hh": s * jax.random.normal(keys[6], (D, 4 * D), jnp.float32),
        "b_hh": 0.01 * jax.random.normal(keys[7], (1, 4 * D), jnp.float32),
        "w_cls": s * jax.random.normal(keys[8], (D, num_classes), jnp.float32),
        "b_cls": 0.01 * jax.random.normal(keys[9], (1, num_classes), jnp.float32),
    }
    return p


if __name__ == "__main__":
    B, S, F, C = 2, 8, 16, 10        # batch, seq_len, num_features, num_classes
    key = jax.random.PRNGKey(0)
    kx, kp = jax.random.split(key)

    x = jax.random.normal(kx, (B, S, F), jnp.float32)
    params = make_params(kp, F, C)

    x_pairs = generate_frame_pairs(x)                    # (B, S, 2F)

    out = global_selector_forward(x_pairs, params)       # (B, S, C)
    out = jax.block_until_ready(out)

    ref = jax.block_until_ready(reference_forward(x_pairs, params))
    assert out.shape == (B, S, C)
    assert jnp.allclose(out, ref, atol=2e-4, rtol=2e-4), (
        f"max abs diff = {jnp.max(jnp.abs(out - ref))}")

    print("KERNEL_OK")
</pallas_src>

<mosaic_0001>
module attributes {stable_mosaic.version = 11 : i64} {
  func.func @global_selector_kernel(%arg0: i32, %arg1: memref<4xf32, #tpu.memory_space<smem>>, %arg2: memref<8x8x32xf32, #tpu.memory_space<vmem>>, %arg3: memref<32x1xf32, #tpu.memory_space<vmem>>, %arg4: memref<32x1xf32, #tpu.memory_space<vmem>>, %arg5: memref<32x1xf32, #tpu.memory_space<vmem>>, %arg6: memref<32x1xf32, #tpu.memory_space<vmem>>, %arg7: memref<32x1xf32, #tpu.memory_space<vmem>>, %arg8: memref<32x1xf32, #tpu.memory_space<vmem>>, %arg9: memref<32x128xf32, #tpu.memory_space<vmem>>, %arg10: memref<32x128xf32, #tpu.memory_space<vmem>>, %arg11: memref<1x128xf32, #tpu.memory_space<vmem>>, %arg12: memref<32x128xf32, #tpu.memory_space<vmem>>, %arg13: memref<1x128xf32, #tpu.memory_space<vmem>>, %arg14: memref<8x8x128xf32, #tpu.memory_space<vmem>>, %arg15: memref<8x8x128xf32, #tpu.memory_space<vmem>>, %arg16: memref<8x8x32xf32, #tpu.memory_space<vmem>>) attributes {dimension_semantics = [#tpu.dimension_semantics<parallel>], iteration_bounds = array<i64: 1>, scalar_prefetch = 1 : i64, scratch_operands = 2 : i64, tpu.core_type = #tpu.core_type<tc>, window_params = [{transform_indices = @transform_0, window_bounds = array<i64: 8, 8, 32>}, {pipeline_mode = #tpu.pipeline_mode<synchronous>, transform_indices = @transform_1, window_bounds = array<i64: 32, 1>}, {pipeline_mode = #tpu.pipeline_mode<synchronous>, transform_indices = @transform_2, window_bounds = array<i64: 32, 1>}, {pipeline_mode = #tpu.pipeline_mode<synchronous>, transform_indices = @transform_3, window_bounds = array<i64: 32, 1>}, {pipeline_mode = #tpu.pipeline_mode<synchronous>, transform_indices = @transform_4, window_bounds = array<i64: 32, 1>}, {pipeline_mode = #tpu.pipeline_mode<synchronous>, transform_indices = @transform_5, window_bounds = array<i64: 32, 1>}, {pipeline_mode = #tpu.pipeline_mode<synchronous>, transform_indices = @transform_6, window_bounds = array<i64: 32, 1>}, {pipeline_mode = #tpu.pipeline_mode<synchronous>, transform_indices = @transform_7, window_bounds = array<i64: 32, 128>}, {pipeline_mode = #tpu.pipeline_mode<synchronous>, transform_indices = @transform_8, window_bounds = array<i64: 32, 128>}, {pipeline_mode = #tpu.pipeline_mode<synchronous>, transform_indices = @transform_9, window_bounds = array<i64: 1, 128>}, {pipeline_mode = #tpu.pipeline_mode<synchronous>, transform_indices = @transform_10, window_bounds = array<i64: 32, 128>}, {pipeline_mode = #tpu.pipeline_mode<synchronous>, transform_indices = @transform_11, window_bounds = array<i64: 1, 128>}, {transform_indices = @transform_12, window_bounds = array<i64: 8, 8, 128>}]} {
    %c0 = arith.constant 0 : index
    %0 = memref.load %arg1[%c0] : memref<4xf32, #tpu.memory_space<smem>>
    %c1 = arith.constant 1 : index
    %1 = memref.load %arg1[%c1] : memref<4xf32, #tpu.memory_space<smem>>
    %c2 = arith.constant 2 : index
    %2 = memref.load %arg1[%c2] : memref<4xf32, #tpu.memory_space<smem>>
    %c3 = arith.constant 3 : index
    %3 = memref.load %arg1[%c3] : memref<4xf32, #tpu.memory_space<smem>>
    %c0_0 = arith.constant 0 : index
    %c0_1 = arith.constant 0 : index
    %c0_2 = arith.constant 0 : index
    %4 = vector.load %arg2[%c0_0, %c0_1, %c0_2] : memref<8x8x32xf32, #tpu.memory_space<vmem>>, vector<8x8x32xf32>
    %5 = vector.shape_cast %4 : vector<8x8x32xf32> to vector<64x32xf32>
    %c0_3 = arith.constant 0 : index
    %c0_4 = arith.constant 0 : index
    %6 = vector.load %arg3[%c0_3, %c0_4] : memref<32x1xf32, #tpu.memory_space<vmem>>, vector<32x1xf32>
    %cst = arith.constant dense<0.000000e+00> : vector<64x1xf32>
    %7 = tpu.matmul %5, %6, %cst {dimension_numbers = #tpu.dot_dimension_numbers<[1], [0], [0], [1], [0, 0, 1, 1], [], []>} : vector<64x32xf32>, vector<32x1xf32>, vector<64x1xf32> -> vector<64x1xf32>
    %8 = vector.broadcast %0 : f32 to vector<64x1xf32>
    %9 = arith.addf %7, %8 : vector<64x1xf32>
    %10 = arith.negf %9 : vector<64x1xf32>
    %11 = math.exp %10 : vector<64x1xf32>
    %cst_5 = arith.constant 1.000000e+00 : f32
    %12 = vector.broadcast %cst_5 : f32 to vector<64x1xf32>
    %13 = arith.addf %12, %11 : vector<64x1xf32>
    %14 = arith.divf %12, %13 : vector<64x1xf32>
    %15 = vector.shape_cast %14 : vector<64x1xf32> to vector<8x8x1xf32>
    %16 = vector.broadcast %15 : vector<8x8x1xf32> to vector<8x8x32xf32>
    %17 = arith.mulf %4, %16 : vector<8x8x32xf32>
    %cst_6 = arith.constant dense<0.000000e+00> : vector<8x32xf32>
    %18 = vector.multi_reduction <add>, %17, %cst_6 [0] : vector<8x8x32xf32> to vector<8x32xf32>
    %cst_7 = arith.constant dense<0.000000e+00> : vector<8x1xf32>
    %19 = vector.multi_reduction <add>, %15, %cst_7 [0] : vector<8x8x1xf32> to vector<8x1xf32>
    %20 = vector.broadcast %19 : vector<8x1xf32> to vector<8x32xf32>
    %21 = arith.divf %18, %20 : vector<8x32xf32>
    %c0_8 = arith.constant 0 : index
    %c0_9 = arith.constant 0 : index
    %22 = vector.load %arg4[%c0_8, %c0_9] : memref<32x1xf32, #tpu.memory_space<vmem>>, vector<32x1xf32>
    %cst_10 = arith.constant dense<0.000000e+00> : vector<64x1xf32>
    %23 = tpu.matmul %5, %22, %cst_10 {dimension_numbers = #tpu.dot_dimension_numbers<[1], [0], [0], [1], [0, 0, 1, 1], [], []>} : vector<64x32xf32>, vector<32x1xf32>, vector<64x1xf32> -> vector<64x1xf32>
    %c0_11 = arith.constant 0 : index
    %c0_12 = arith.constant 0 : index
    %24 = vector.load %arg5[%c0_11, %c0_12] : memref<32x1xf32, #tpu.memory_space<vmem>>, vector<32x1xf32>
    %cst_13 = arith.constant dense<0.000000e+00> : vector<8x1xf32>
    %25 = tpu.matmul %21, %24, %cst_13 {dimension_numbers = #tpu.dot_dimension_numbers<[1], [0], [0], [1], [0, 0, 1, 1], [], []>} : vector<8x32xf32>, vector<32x1xf32>, vector<8x1xf32> -> vector<8x1xf32>
    %26 = vector.shape_cast %23 : vector<64x1xf32> to vector<8x8x1xf32>
    %27 = vector.shape_cast %25 : vector<8x1xf32> to vector<1x8x1xf32>
    %28 = vector.broadcast %27 : vector<1x8x1xf32> to vector<8x8x1xf32>
    %29 = arith.addf %26, %28 : vector<8x8x1xf32>
    %30 = vector.broadcast %1 : f32 to vector<8x8x1xf32>
    %31 = arith.addf %29, %30 : vector<8x8x1xf32>
    %32 = arith.negf %31 : vector<8x8x1xf32>
    %33 = math.exp %32 : vector<8x8x1xf32>
    %cst_14 = arith.constant 1.000000e+00 : f32
    %34 = vector.broadcast %cst_14 : f32 to vector<8x8x1xf32>
    %35 = arith.addf %34, %33 : vector<8x8x1xf32>
    %36 = arith.divf %34, %35 : vector<8x8x1xf32>
    %37 = vector.extract_strided_slice %36 {offsets = [0, 0, 0], sizes = [1, 8, 1], strides = [1, 1, 1]} : vector<8x8x1xf32> to vector<1x8x1xf32>
    %38 = vector.shape_cast %37 : vector<1x8x1xf32> to vector<8x1xf32>
    %39 = vector.extract_strided_slice %36 {offsets = [1, 0, 0], sizes = [1, 8, 1], strides = [1, 1, 1]} : vector<8x8x1xf32> to vector<1x8x1xf32>
    %40 = vector.shape_cast %39 : vector<1x8x1xf32> to vector<8x1xf32>
    %41 = arith.addf %38, %40 : vector<8x1xf32>
    %42 = vector.extract_strided_slice %36 {offsets = [2, 0, 0], sizes = [1, 8, 1], strides = [1, 1, 1]} : vector<8x8x1xf32> to vector<1x8x1xf32>
    %43 = vector.shape_cast %42 : vector<1x8x1xf32> to vector<8x1xf32>
    %44 = arith.addf %41, %43 : vector<8x1xf32>
    %45 = vector.extract_strided_slice %36 {offsets = [3, 0, 0], sizes = [1, 8, 1], strides = [1, 1, 1]} : vector<8x8x1xf32> to vector<1x8x1xf32>
    %46 = vector.shape_cast %45 : vector<1x8x1xf32> to vector<8x1xf32>
    %47 = arith.addf %44, %46 : vector<8x1xf32>
    %48 = vector.extract_strided_slice %36 {offsets = [4, 0, 0], sizes = [1, 8, 1], strides = [1, 1, 1]} : vector<8x8x1xf32> to vector<1x8x1xf32>
    %49 = vector.shape_cast %48 : vector<1x8x1xf32> to vector<8x1xf32>
    %50 = arith.addf %47, %49 : vector<8x1xf32>
    %51 = vector.extract_strided_slice %36 {offsets = [5, 0, 0], sizes = [1, 8, 1], strides = [1, 1, 1]} : vector<8x8x1xf32> to vector<1x8x1xf32>
    %52 = vector.shape_cast %51 : vector<1x8x1xf32> to vector<8x1xf32>
    %53 = arith.addf %50, %52 : vector<8x1xf32>
    %54 = vector.extract_strided_slice %36 {offsets = [6, 0, 0], sizes = [1, 8, 1], strides = [1, 1, 1]} : vector<8x8x1xf32> to vector<1x8x1xf32>
    %55 = vector.shape_cast %54 : vector<1x8x1xf32> to vector<8x1xf32>
    %56 = arith.addf %53, %55 : vector<8x1xf32>
    %57 = vector.extract_strided_slice %36 {offsets = [7, 0, 0], sizes = [1, 8, 1], strides = [1, 1, 1]} : vector<8x8x1xf32> to vector<1x8x1xf32>
    %58 = vector.shape_cast %57 : vector<1x8x1xf32> to vector<8x1xf32>
    %59 = arith.addf %56, %58 : vector<8x1xf32>
    %60 = vector.shape_cast %38 : vector<8x1xf32> to vector<1x8x1xf32>
    %61 = vector.shape_cast %41 : vector<8x1xf32> to vector<1x8x1xf32>
    %62 = vector.shape_cast %44 : vector<8x1xf32> to vector<1x8x1xf32>
    %63 = vector.shape_cast %47 : vector<8x1xf32> to vector<1x8x1xf32>
    %64 = vector.shape_cast %50 : vector<8x1xf32> to vector<1x8x1xf32>
    %65 = vector.shape_cast %53 : vector<8x1xf32> to vector<1x8x1xf32>
    %66 = vector.shape_cast %56 : vector<8x1xf32> to vector<1x8x1xf32>
    %67 = vector.shape_cast %59 : vector<8x1xf32> to vector<1x8x1xf32>
    %68 = tpu.concatenate %60, %61, %62, %63, %64, %65, %66, %67 in 0 : vector<1x8x1xf32>, vector<1x8x1xf32>, vector<1x8x1xf32>, vector<1x8x1xf32>, vector<1x8x1xf32>, vector<1x8x1xf32>, vector<1x8x1xf32>, vector<1x8x1xf32> -> vector<8x8x1xf32>
    %69 = vector.broadcast %68 : vector<8x8x1xf32> to vector<8x8x32xf32>
    %70 = arith.mulf %4, %69 : vector<8x8x32xf32>
    %71 = vector.shape_cast %70 : vector<8x8x32xf32> to vector<64x32xf32>
    %c0_15 = arith.constant 0 : index
    %c0_16 = arith.constant 0 : index
    %72 = vector.load %arg9[%c0_15, %c0_16] : memref<32x128xf32, #tpu.memory_space<vmem>>, vector<32x128xf32>
    %cst_17 = arith.constant dense<0.000000e+00> : vector<64x128xf32>
    %73 = tpu.matmul %71, %72, %cst_17 {dimension_numbers = #tpu.dot_dimension_numbers<[1], [0], [0], [1], [0, 0, 1, 1], [], []>} : vector<64x32xf32>, vector<32x128xf32>, vector<64x128xf32> -> vector<64x128xf32>
    %c0_18 = arith.constant 0 : index
    %c0_19 = arith.constant 0 : index
    %74 = vector.load %arg11[%c0_18, %c0_19] : memref<1x128xf32, #tpu.memory_space<vmem>>, vector<1x128xf32>
    %75 = vector.broadcast %74 : vector<1x128xf32> to vector<64x128xf32>
    %76 = arith.addf %73, %75 : vector<64x128xf32>
    %77 = vector.shape_cast %76 : vector<64x128xf32> to vector<8x8x128xf32>
    %c0_20 = arith.constant 0 : index
    %c0_21 = arith.constant 0 : index
    %c0_22 = arith.constant 0 : index
    %78 = vector.load %arg15[%c0_20, %c0_21, %c0_22] : memref<8x8x128xf32, #tpu.memory_space<vmem>>, vector<8x8x128xf32>
    tpu.vector_store %arg15[%c0_20, %c0_21, %c0_22], %77 {strides = array<i32>} : memref<8x8x128xf32, #tpu.memory_space<vmem>>, vector<8x8x128xf32>,
    %c0_23 = arith.constant 0 : index
    %c0_24 = arith.constant 0 : index
    %79 = vector.load %arg10[%c0_23, %c0_24] : memref<32x128xf32, #tpu.memory_space<vmem>>, vector<32x128xf32>
    %cst_25 = arith.constant 0.000000e+00 : f32
    %80 = vector.broadcast %cst_25 : f32 to vector<8x32xf32>
    %cst_26 = arith.constant 0.000000e+00 : f32
    %81 = vector.broadcast %cst_26 : f32 to vector<8x32xf32>
    %c0_27 = arith.constant 0 : index
    %c0_28 = arith.constant 0 : index
    %c0_29 = arith.constant 0 : index
    %82 = vector.load %arg15[%c0_27, %c0_28, %c0_29] : memref<8x8x128xf32, #tpu.memory_space<vmem>>, vector<1x8x128xf32>
    %83 = vector.shape_cast %82 : vector<1x8x128xf32> to vector<8x128xf32>
    %cst_30 = arith.constant dense<0.000000e+00> : vector<8x128xf32>
    %84 = tpu.matmul %80, %79, %cst_30 {dimension_numbers = #tpu.dot_dimension_numbers<[1], [0], [0], [1], [0, 0, 1, 1], [], []>} : vector<8x32xf32>, vector<32x128xf32>, vector<8x128xf32> -> vector<8x128xf32>
    %85 = arith.addf %83, %84 : vector<8x128xf32>
    %86 = arith.negf %85 : vector<8x128xf32>
    %87 = math.exp %86 : vector<8x128xf32>
    %cst_31 = arith.constant 1.000000e+00 : f32
    %88 = vector.broadcast %cst_31 : f32 to vector<8x128xf32>
    %89 = arith.addf %88, %87 : vector<8x128xf32>
    %90 = arith.divf %88, %89 : vector<8x128xf32>
    %91 = math.tanh %85 : vector<8x128xf32>
    %92 = vector.extract_strided_slice %90 {offsets = [0, 0], sizes = [8, 32], strides = [1, 1]} : vector<8x128xf32> to vector<8x32xf32>
    %93 = vector.extract_strided_slice %90 {offsets = [0, 32], sizes = [8, 32], strides = [1, 1]} : vector<8x128xf32> to vector<8x32xf32>
    %94 = vector.extract_strided_slice %91 {offsets = [0, 64], sizes = [8, 32], strides = [1, 1]} : vector<8x128xf32> to vector<8x32xf32>
    %95 = vector.extract_strided_slice %90 {offsets = [0, 96], sizes = [8, 32], strides = [1, 1]} : vector<8x128xf32> to vector<8x32xf32>
    %96 = arith.mulf %93, %81 : vector<8x32xf32>
    %97 = arith.mulf %92, %94 : vector<8x32xf32>
    %98 = arith.addf %96, %97 : vector<8x32xf32>
    %99 = math.tanh %98 : vector<8x32xf32>
    %100 = arith.mulf %95, %99 : vector<8x32xf32>
    %c0_32 = arith.constant 0 : index
    %c0_33 = arith.constant 0 : index
    %c0_34 = arith.constant 0 : index
    %101 = vector.load %arg16[%c0_32, %c0_33, %c0_34] : memref<8x8x32xf32, #tpu.memory_space<vmem>>, vector<1x8x32xf32>
    %102 = vector.shape_cast %101 : vector<1x8x32xf32> to vector<8x32xf32>
    %103 = vector.shape_cast %100 : vector<8x32xf32> to vector<1x8x32xf32>
    tpu.vector_store %arg16[%c0_32, %c0_33, %c0_34], %103 {strides = array<i32>} : memref<8x8x32xf32, #tpu.memory_space<vmem>>, vector<1x8x32xf32>,
    %c1_35 = arith.constant 1 : index
    %c0_36 = arith.constant 0 : index
    %c0_37 = arith.constant 0 : index
    %104 = vector.load %arg15[%c1_35, %c0_36, %c0_37] : memref<8x8x128xf32, #tpu.memory_space<vmem>>, vector<1x8x128xf32>
    %105 = vector.shape_cast %104 : vector<1x8x128xf32> to vector<8x128xf32>
    %cst_38 = arith.constant dense<0.000000e+00> : vector<8x128xf32>
    %106 = tpu.matmul %100, %79, %cst_38 {dimension_numbers = #tpu.dot_dimension_numbers<[1], [0], [0], [1], [0, 0, 1, 1], [], []>} : vector<8x32xf32>, vector<32x128xf32>, vector<8x128xf32> -> vector<8x128xf32>
    %107 = arith.addf %105, %106 : vector<8x128xf32>
    %108 = arith.negf %107 : vector<8x128xf32>
    %109 = math.exp %108 : vector<8x128xf32>
    %cst_39 = arith.constant 1.000000e+00 : f32
    %110 = vector.broadcast %cst_39 : f32 to vector<8x128xf32>
    %111 = arith.addf %110, %109 : vector<8x128xf32>
    %112 = arith.divf %110, %111 : vector<8x128xf32>
    %113 = math.tanh %107 : vector<8x128xf32>
    %114 = vector.extract_strided_slice %112 {offsets = [0, 0], sizes = [8, 32], strides = [1, 1]} : vector<8x128xf32> to vector<8x32xf32>
    %115 = vector.extract_strided_slice %112 {offsets = [0, 32], sizes = [8, 32], strides = [1, 1]} : vector<8x128xf32> to vector<8x32xf32>
    %116 = vector.extract_strided_slice %113 {offsets = [0, 64], sizes = [8, 32], strides = [1, 1]} : vector<8x128xf32> to vector<8x32xf32>
    %117 = vector.extract_strided_slice %112 {offsets = [0, 96], sizes = [8, 32], strides = [1, 1]} : vector<8x128xf32> to vector<8x32xf32>
    %118 = arith.mulf %115, %98 : vector<8x32xf32>
    %119 = arith.mulf %114, %116 : vector<8x32xf32>
    %120 = arith.addf %118, %119 : vector<8x32xf32>
    %121 = math.tanh %120 : vector<8x32xf32>
    %122 = arith.mulf %117, %121 : vector<8x32xf32>
    %c1_40 = arith.constant 1 : index
    %c0_41 = arith.constant 0 : index
    %c0_42 = arith.constant 0 : index
    %123 = vector.load %arg16[%c1_40, %c0_41, %c0_42] : memref<8x8x32xf32, #tpu.memory_space<vmem>>, vector<1x8x32xf32>
    %124 = vector.shape_cast %123 : vector<1x8x32xf32> to vector<8x32xf32>
    %125 = vector.shape_cast %122 : vector<8x32xf32> to vector<1x8x32xf32>
    tpu.vector_store %arg16[%c1_40, %c0_41, %c0_42], %125 {strides = array<i32>} : memref<8x8x32xf32, #tpu.memory_space<vmem>>, vector<1x8x32xf32>,
    %c2_43 = arith.constant 2 : index
    %c0_44 = arith.constant 0 : index
    %c0_45 = arith.constant 0 : index
    %126 = vector.load %arg15[%c2_43, %c0_44, %c0_45] : memref<8x8x128xf32, #tpu.memory_space<vmem>>, vector<1x8x128xf32>
    %127 = vector.shape_cast %126 : vector<1x8x128xf32> to vector<8x128xf32>
    %cst_46 = arith.constant dense<0.000000e+00> : vector<8x128xf32>
    %128 = tpu.matmul %122, %79, %cst_46 {dimension_numbers = #tpu.dot_dimension_numbers<[1], [0], [0], [1], [0, 0, 1, 1], [], []>} : vector<8x32xf32>, vector<32x128xf32>, vector<8x128xf32> -> vector<8x128xf32>
    %129 = arith.addf %127, %128 : vector<8x128xf32>
    %130 = arith.negf %129 : vector<8x128xf32>
    %131 = math.exp %130 : vector<8x128xf32>
    %cst_47 = arith.constant 1.000000e+00 : f32
    %132 = vector.broadcast %cst_47 : f32 to vector<8x128xf32>
    %133 = arith.addf %132, %131 : vector<8x128xf32>
    %134 = arith.divf %132, %133 : vector<8x128xf32>
    %135 = math.tanh %129 : vector<8x128xf32>
    %136 = vector.extract_strided_slice %134 {offsets = [0, 0], sizes = [8, 32], strides = [1, 1]} : vector<8x128xf32> to vector<8x32xf32>
    %137 = vector.extract_strided_slice %134 {offsets = [0, 32], sizes = [8, 32], strides = [1, 1]} : vector<8x128xf32> to vector<8x32xf32>
    %138 = vector.extract_strided_slice %135 {offsets = [0, 64], sizes = [8, 32], strides = [1, 1]} : vector<8x128xf32> to vector<8x32xf32>
    %139 = vector.extract_strided_slice %134 {offsets = [0, 96], sizes = [8, 32], strides = [1, 1]} : vector<8x128xf32> to vector<8x32xf32>
    %140 = arith.mulf %137, %120 : vector<8x32xf32>
    %141 = arith.mulf %136, %138 : vector<8x32xf32>
    %142 = arith.addf %140, %141 : vector<8x32xf32>
    %143 = math.tanh %142 : vector<8x32xf32>
    %144 = arith.mulf %139, %143 : vector<8x32xf32>
    %c2_48 = arith.constant 2 : index
    %c0_49 = arith.constant 0 : index
    %c0_50 = arith.constant 0 : index
    %145 = vector.load %arg16[%c2_48, %c0_49, %c0_50] : memref<8x8x32xf32, #tpu.memory_space<vmem>>, vector<1x8x32xf32>
    %146 = vector.shape_cast %145 : vector<1x8x32xf32> to vector<8x32xf32>
    %147 = vector.shape_cast %144 : vector<8x32xf32> to vector<1x8x32xf32>
    tpu.vector_store %arg16[%c2_48, %c0_49, %c0_50], %147 {strides = array<i32>} : memref<8x8x32xf32, #tpu.memory_space<vmem>>, vector<1x8x32xf32>,
    %c3_51 = arith.constant 3 : index
    %c0_52 = arith.constant 0 : index
    %c0_53 = arith.constant 0 : index
    %148 = vector.load %arg15[%c3_51, %c0_52, %c0_53] : memref<8x8x128xf32, #tpu.memory_space<vmem>>, vector<1x8x128xf32>
    %149 = vector.shape_cast %148 : vector<1x8x128xf32> to vector<8x128xf32>
    %cst_54 = arith.constant dense<0.000000e+00> : vector<8x128xf32>
    %150 = tpu.matmul %144, %79, %cst_54 {dimension_numbers = #tpu.dot_dimension_numbers<[1], [0], [0], [1], [0, 0, 1, 1], [], []>} : vector<8x32xf32>, vector<32x128xf32>, vector<8x128xf32> -> vector<8x128xf32>
    %151 = arith.addf %149, %150 : vector<8x128xf32>
    %152 = arith.negf %151 : vector<8x128xf32>
    %153 = math.exp %152 : vector<8x128xf32>
    %cst_55 = arith.constant 1.000000e+00 : f32
    %154 = vector.broadcast %cst_55 : f32 to vector<8x128xf32>
    %155 = arith.addf %154, %153 : vector<8x128xf32>
    %156 = arith.divf %154, %155 : vector<8x128xf32>
    %157 = math.tanh %151 : vector<8x128xf32>
    %158 = vector.extract_strided_slice %156 {offsets = [0, 0], sizes = [8, 32], strides = [1, 1]} : vector<8x128xf32> to vector<8x32xf32>
    %159 = vector.extract_strided_slice %156 {offsets = [0, 32], sizes = [8, 32], strides = [1, 1]} : vector<8x128xf32> to vector<8x32xf32>
    %160 = vector.extract_strided_slice %157 {offsets = [0, 64], sizes = [8, 32], strides = [1, 1]} : vector<8x128xf32> to vector<8x32xf32>
    %161 = vector.extract_strided_slice %156 {offsets = [0, 96], sizes = [8, 32], strides = [1, 1]} : vector<8x128xf32> to vector<8x32xf32>
    %162 = arith.mulf %159, %142 : vector<8x32xf32>
    %163 = arith.mulf %158, %160 : vector<8x32xf32>
    %164 = arith.addf %162, %163 : vector<8x32xf32>
    %165 = math.tanh %164 : vector<8x32xf32>
    %166 = arith.mulf %161, %165 : vector<8x32xf32>
    %c3_56 = arith.constant 3 : index
    %c0_57 = arith.constant 0 : index
    %c0_58 = arith.constant 0 : index
    %167 = vector.load %arg16[%c3_56, %c0_57, %c0_58] : memref<8x8x32xf32, #tpu.memory_space<vmem>>, vector<1x8x32xf32>
    %168 = vector.shape_cast %167 : vector<1x8x32xf32> to vector<8x32xf32>
    %169 = vector.shape_cast %166 : vector<8x32xf32> to vector<1x8x32xf32>
    tpu.vector_store %arg16[%c3_56, %c0_57, %c0_58], %169 {strides = array<i32>} : memref<8x8x32xf32, #tpu.memory_space<vmem>>, vector<1x8x32xf32>,
    %c4 = arith.constant 4 : index
    %c0_59 = arith.constant 0 : index
    %c0_60 = arith.constant 0 : index
    %170 = vector.load %arg15[%c4, %c0_59, %c0_60] : memref<8x8x128xf32, #tpu.memory_space<vmem>>, vector<1x8x128xf32>
    %171 = vector.shape_cast %170 : vector<1x8x128xf32> to vector<8x128xf32>
    %cst_61 = arith.constant dense<0.000000e+00> : vector<8x128xf32>
    %172 = tpu.matmul %166, %79, %cst_61 {dimension_numbers = #tpu.dot_dimension_numbers<[1], [0], [0], [1], [0, 0, 1, 1], [], []>} : vector<8x32xf32>, vector<32x128xf32>, vector<8x128xf32> -> vector<8x128xf32>
    %173 = arith.addf %171, %172 : vector<8x128xf32>
    %174 = arith.negf %173 : vector<8x128xf32>
    %175 = math.exp %174 : vector<8x128xf32>
    %cst_62 = arith.constant 1.000000e+00 : f32
    %176 = vector.broadcast %cst_62 : f32 to vector<8x128xf32>
    %177 = arith.addf %176, %175 : vector<8x128xf32>
    %178 = arith.divf %176, %177 : vector<8x128xf32>
    %179 = math.tanh %173 : vector<8x128xf32>
    %180 = vector.extract_strided_slice %178 {offsets = [0, 0], sizes = [8, 32], strides = [1, 1]} : vector<8x128xf32> to vector<8x32xf32>
    %181 = vector.extract_strided_slice %178 {offsets = [0, 32], sizes = [8, 32], strides = [1, 1]} : vector<8x128xf32> to vector<8x32xf32>
    %182 = vector.extract_strided_slice %179 {offsets = [0, 64], sizes = [8, 32], strides = [1, 1]} : vector<8x128xf32> to vector<8x32xf32>
    %183 = vector.extract_strided_slice %178 {offsets = [0, 96], sizes = [8, 32], strides = [1, 1]} : vector<8x128xf32> to vector<8x32xf32>
    %184 = arith.mulf %181, %164 : vector<8x32xf32>
    %185 = arith.mulf %180, %182 : vector<8x32xf32>
    %186 = arith.addf %184, %185 : vector<8x32xf32>
    %187 = math.tanh %186 : vector<8x32xf32>
    %188 = arith.mulf %183, %187 : vector<8x32xf32>
    %c4_63 = arith.constant 4 : index
    %c0_64 = arith.constant 0 : index
    %c0_65 = arith.constant 0 : index
    %189 = vector.load %arg16[%c4_63, %c0_64, %c0_65] : memref<8x8x32xf32, #tpu.memory_space<vmem>>, vector<1x8x32xf32>
    %190 = vector.shape_cast %189 : vector<1x8x32xf32> to vector<8x32xf32>
    %191 = vector.shape_cast %188 : vector<8x32xf32> to vector<1x8x32xf32>
    tpu.vector_store %arg16[%c4_63, %c0_64, %c0_65], %191 {strides = array<i32>} : memref<8x8x32xf32, #tpu.memory_space<vmem>>, vector<1x8x32xf32>,
    %c5 = arith.constant 5 : index
    %c0_66 = arith.constant 0 : index
    %c0_67 = arith.constant 0 : index
    %192 = vector.load %arg15[%c5, %c0_66, %c0_67] : memref<8x8x128xf32, #tpu.memory_space<vmem>>, vector<1x8x128xf32>
    %193 = vector.shape_cast %192 : vector<1x8x128xf32> to vector<8x128xf32>
    %cst_68 = arith.constant dense<0.000000e+00> : vector<8x128xf32>
    %194 = tpu.matmul %188, %79, %cst_68 {dimension_numbers = #tpu.dot_dimension_numbers<[1], [0], [0], [1], [0, 0, 1, 1], [], []>} : vector<8x32xf32>, vector<32x128xf32>, vector<8x128xf32> -> vector<8x128xf32>
    %195 = arith.addf %193, %194 : vector<8x128xf32>
    %196 = arith.negf %195 : vector<8x128xf32>
    %197 = math.exp %196 : vector<8x128xf32>
    %cst_69 = arith.constant 1.000000e+00 : f32
    %198 = vector.broadcast %cst_69 : f32 to vector<8x128xf32>
    %199 = arith.addf %198, %197 : vector<8x128xf32>
    %200 = arith.divf %198, %199 : vector<8x128xf32>
    %201 = math.tanh %195 : vector<8x128xf32>
    %202 = vector.extract_strided_slice %200 {offsets = [0, 0], sizes = [8, 32], strides = [1, 1]} : vector<8x128xf32> to vector<8x32xf32>
    %203 = vector.extract_strided_slice %200 {offsets = [0, 32], sizes = [8, 32], strides = [1, 1]} : vector<8x128xf32> to vector<8x32xf32>
    %204 = vector.extract_strided_slice %201 {offsets = [0, 64], sizes = [8, 32], strides = [1, 1]} : vector<8x128xf32> to vector<8x32xf32>
    %205 = vector.extract_strided_slice %200 {offsets = [0, 96], sizes = [8, 32], strides = [1, 1]} : vector<8x128xf32> to vector<8x32xf32>
    %206 = arith.mulf %203, %186 : vector<8x32xf32>
    %207 = arith.mulf %202, %204 : vector<8x32xf32>
    %208 = arith.addf %206, %207 : vector<8x32xf32>
    %209 = math.tanh %208 : vector<8x32xf32>
    %210 = arith.mulf %205, %209 : vector<8x32xf32>
    %c5_70 = arith.constant 5 : index
    %c0_71 = arith.constant 0 : index
    %c0_72 = arith.constant 0 : index
    %211 = vector.load %arg16[%c5_70, %c0_71, %c0_72] : memref<8x8x32xf32, #tpu.memory_space<vmem>>, vector<1x8x32xf32>
    %212 = vector.shape_cast %211 : vector<1x8x32xf32> to vector<8x32xf32>
    %213 = vector.shape_cast %210 : vector<8x32xf32> to vector<1x8x32xf32>
    tpu.vector_store %arg16[%c5_70, %c0_71, %c0_72], %213 {strides = array<i32>} : memref<8x8x32xf32, #tpu.memory_space<vmem>>, vector<1x8x32xf32>,
    %c6 = arith.constant 6 : index
    %c0_73 = arith.constant 0 : index
    %c0_74 = arith.constant 0 : index
    %214 = vector.load %arg15[%c6, %c0_73, %c0_74] : memref<8x8x128xf32, #tpu.memory_space<vmem>>, vector<1x8x128xf32>
    %215 = vector.shape_cast %214 : vector<1x8x128xf32> to vector<8x128xf32>
    %cst_75 = arith.constant dense<0.000000e+00> : vector<8x128xf32>
    %216 = tpu.matmul %210, %79, %cst_75 {dimension_numbers = #tpu.dot_dimension_numbers<[1], [0], [0], [1], [0, 0, 1, 1], [], []>} : vector<8x32xf32>, vector<32x128xf32>, vector<8x128xf32> -> vector<8x128xf32>
    %217 = arith.addf %215, %216 : vector<8x128xf32>
    %218 = arith.negf %217 : vector<8x128xf32>
    %219 = math.exp %218 : vector<8x128xf32>
    %cst_76 = arith.constant 1.000000e+00 : f32
    %220 = vector.broadcast %cst_76 : f32 to vector<8x128xf32>
    %221 = arith.addf %220, %219 : vector<8x128xf32>
    %222 = arith.divf %220, %221 : vector<8x128xf32>
    %223 = math.tanh %217 : vector<8x128xf32>
    %224 = vector.extract_strided_slice %222 {offsets = [0, 0], sizes = [8, 32], strides = [1, 1]} : vector<8x128xf32> to vector<8x32xf32>
    %225 = vector.extract_strided_slice %222 {offsets = [0, 32], sizes = [8, 32], strides = [1, 1]} : vector<8x128xf32> to vector<8x32xf32>
    %226 = vector.extract_strided_slice %223 {offsets = [0, 64], sizes = [8, 32], strides = [1, 1]} : vector<8x128xf32> to vector<8x32xf32>
    %227 = vector.extract_strided_slice %222 {offsets = [0, 96], sizes = [8, 32], strides = [1, 1]} : vector<8x128xf32> to vector<8x32xf32>
    %228 = arith.mulf %225, %208 : vector<8x32xf32>
    %229 = arith.mulf %224, %226 : vector<8x32xf32>
    %230 = arith.addf %228, %229 : vector<8x32xf32>
    %231 = math.tanh %230 : vector<8x32xf32>
    %232 = arith.mulf %227, %231 : vector<8x32xf32>
    %c6_77 = arith.constant 6 : index
    %c0_78 = arith.constant 0 : index
    %c0_79 = arith.constant 0 : index
    %233 = vector.load %arg16[%c6_77, %c0_78, %c0_79] : memref<8x8x32xf32, #tpu.memory_space<vmem>>, vector<1x8x32xf32>
    %234 = vector.shape_cast %233 : vector<1x8x32xf32> to vector<8x32xf32>
    %235 = vector.shape_cast %232 : vector<8x32xf32> to vector<1x8x32xf32>
    tpu.vector_store %arg16[%c6_77, %c0_78, %c0_79], %235 {strides = array<i32>} : memref<8x8x32xf32, #tpu.memory_space<vmem>>, vector<1x8x32xf32>,
    %c7 = arith.constant 7 : index
    %c0_80 = arith.constant 0 : index
    %c0_81 = arith.constant 0 : index
    %236 = vector.load %arg15[%c7, %c0_80, %c0_81] : memref<8x8x128xf32, #tpu.memory_space<vmem>>, vector<1x8x128xf32>
    %237 = vector.shape_cast %236 : vector<1x8x128xf32> to vector<8x128xf32>
    %cst_82 = arith.constant dense<0.000000e+00> : vector<8x128xf32>
    %238 = tpu.matmul %232, %79, %cst_82 {dimension_numbers = #tpu.dot_dimension_numbers<[1], [0], [0], [1], [0, 0, 1, 1], [], []>} : vector<8x32xf32>, vector<32x128xf32>, vector<8x128xf32> -> vector<8x128xf32>
    %239 = arith.addf %237, %238 : vector<8x128xf32>
    %240 = arith.negf %239 : vector<8x128xf32>
    %241 = math.exp %240 : vector<8x128xf32>
    %cst_83 = arith.constant 1.000000e+00 : f32
    %242 = vector.broadcast %cst_83 : f32 to vector<8x128xf32>
    %243 = arith.addf %242, %241 : vector<8x128xf32>
    %244 = arith.divf %242, %243 : vector<8x128xf32>
    %245 = math.tanh %239 : vector<8x128xf32>
    %246 = vector.extract_strided_slice %244 {offsets = [0, 0], sizes = [8, 32], strides = [1, 1]} : vector<8x128xf32> to vector<8x32xf32>
    %247 = vector.extract_strided_slice %244 {offsets = [0, 32], sizes = [8, 32], strides = [1, 1]} : vector<8x128xf32> to vector<8x32xf32>
    %248 = vector.extract_strided_slice %245 {offsets = [0, 64], sizes = [8, 32], strides = [1, 1]} : vector<8x128xf32> to vector<8x32xf32>
    %249 = vector.extract_strided_slice %244 {offsets = [0, 96], sizes = [8, 32], strides = [1, 1]} : vector<8x128xf32> to vector<8x32xf32>
    %250 = arith.mulf %247, %230 : vector<8x32xf32>
    %251 = arith.mulf %246, %248 : vector<8x32xf32>
    %252 = arith.addf %250, %251 : vector<8x32xf32>
    %253 = math.tanh %252 : vector<8x32xf32>
    %254 = arith.mulf %249, %253 : vector<8x32xf32>
    %c7_84 = arith.constant 7 : index
    %c0_85 = arith.constant 0 : index
    %c0_86 = arith.constant 0 : index
    %255 = vector.load %arg16[%c7_84, %c0_85, %c0_86] : memref<8x8x32xf32, #tpu.memory_space<vmem>>, vector<1x8x32xf32>
    %256 = vector.shape_cast %255 : vector<1x8x32xf32> to vector<8x32xf32>
    %257 = vector.shape_cast %254 : vector<8x32xf32> to vector<1x8x32xf32>
    tpu.vector_store %arg16[%c7_84, %c0_85, %c0_86], %257 {strides = array<i32>} : memref<8x8x32xf32, #tpu.memory_space<vmem>>, vector<1x8x32xf32>,
    %c0_87 = arith.constant 0 : index
    %c0_88 = arith.constant 0 : index
    %c0_89 = arith.constant 0 : index
    %258 = vector.load %arg16[%c0_87, %c0_88, %c0_89] : memref<8x8x32xf32, #tpu.memory_space<vmem>>, vector<8x8x32xf32>
    %259 = vector.shape_cast %258 : vector<8x8x32xf32> to vector<64x32xf32>
    %c0_90 = arith.constant 0 : index
    %c0_91 = arith.constant 0 : index
    %260 = vector.load %arg6[%c0_90, %c0_91] : memref<32x1xf32, #tpu.memory_space<vmem>>, vector<32x1xf32>
    %cst_92 = arith.constant dense<0.000000e+00> : vector<64x1xf32>
    %261 = tpu.matmul %259, %260, %cst_92 {dimension_numbers = #tpu.dot_dimension_numbers<[1], [0], [0], [1], [0, 0, 1, 1], [], []>} : vector<64x32xf32>, vector<32x1xf32>, vector<64x1xf32> -> vector<64x1xf32>
    %262 = vector.broadcast %2 : f32 to vector<64x1xf32>
    %263 = arith.addf %261, %262 : vector<64x1xf32>
    %264 = vector.shape_cast %263 : vector<64x1xf32> to vector<8x8x1xf32>
    %cst_93 = arith.constant dense<0xFF800000> : vector<8x1xf32>
    %265 = vector.multi_reduction <maximumf>, %264, %cst_93 [0] : vector<8x8x1xf32> to vector<8x1xf32>
    %266 = vector.shape_cast %265 : vector<8x1xf32> to vector<1x8x1xf32>
    %267 = vector.broadcast %266 : vector<1x8x1xf32> to vector<8x8x1xf32>
    %268 = arith.subf %264, %267 : vector<8x8x1xf32>
    %269 = math.exp %268 : vector<8x8x1xf32>
    %cst_94 = arith.constant dense<0.000000e+00> : vector<8x1xf32>
    %270 = vector.multi_reduction <add>, %269, %cst_94 [0] : vector<8x8x1xf32> to vector<8x1xf32>
    %271 = vector.shape_cast %270 : vector<8x1xf32> to vector<1x8x1xf32>
    %272 = vector.broadcast %271 : vector<1x8x1xf32> to vector<8x8x1xf32>
    %273 = arith.divf %269, %272 : vector<8x8x1xf32>
    %274 = vector.broadcast %273 : vector<8x8x1xf32> to vector<8x8x32xf32>
    %275 = arith.mulf %70, %274 : vector<8x8x32xf32>
    %cst_95 = arith.constant dense<0.000000e+00> : vector<8x32xf32>
    %276 = vector.multi_reduction <add>, %275, %cst_95 [0] : vector<8x8x32xf32> to vector<8x32xf32>
    %c0_96 = arith.constant 0 : index
    %c0_97 = arith.constant 0 : index
    %277 = vector.load %arg7[%c0_96, %c0_97] : memref<32x1xf32, #tpu.memory_space<vmem>>, vector<32x1xf32>
    %cst_98 = arith.constant dense<0.000000e+00> : vector<64x1xf32>
    %278 = tpu.matmul %71, %277, %cst_98 {dimension_numbers = #tpu.dot_dimension_numbers<[1], [0], [0], [1], [0, 0, 1, 1], [], []>} : vector<64x32xf32>, vector<32x1xf32>, vector<64x1xf32> -> vector<64x1xf32>
    %c0_99 = arith.constant 0 : index
    %c0_100 = arith.constant 0 : index
    %279 = vector.load %arg8[%c0_99, %c0_100] : memref<32x1xf32, #tpu.memory_space<vmem>>, vector<32x1xf32>
    %cst_101 = arith.constant dense<0.000000e+00> : vector<8x1xf32>
    %280 = tpu.matmul %276, %279, %cst_101 {dimension_numbers = #tpu.dot_dimension_numbers<[1], [0], [0], [1], [0, 0, 1, 1], [], []>} : vector<8x32xf32>, vector<32x1xf32>, vector<8x1xf32> -> vector<8x1xf32>
    %281 = vector.shape_cast %278 : vector<64x1xf32> to vector<8x8x1xf32>
    %282 = vector.shape_cast %280 : vector<8x1xf32> to vector<1x8x1xf32>
    %283 = vector.broadcast %282 : vector<1x8x1xf32> to vector<8x8x1xf32>
    %284 = arith.addf %281, %283 : vector<8x8x1xf32>
    %285 = vector.broadcast %3 : f32 to vector<8x8x1xf32>
    %286 = arith.addf %284, %285 : vector<8x8x1xf32>
    %287 = arith.negf %286 : vector<8x8x1xf32>
    %288 = math.exp %287 : vector<8x8x1xf32>
    %cst_102 = arith.constant 1.000000e+00 : f32
    %289 = vector.broadcast %cst_102 : f32 to vector<8x8x1xf32>
    %290 = arith.addf %289, %288 : vector<8x8x1xf32>
    %291 = arith.divf %289, %290 : vector<8x8x1xf32>
    %292 = vector.extract_strided_slice %291 {offsets = [0, 0, 0], sizes = [1, 8, 1], strides = [1, 1, 1]} : vector<8x8x1xf32> to vector<1x8x1xf32>
    %293 = vector.shape_cast %292 : vector<1x8x1xf32> to vector<8x1xf32>
    %294 = vector.extract_strided_slice %291 {offsets = [1, 0, 0], sizes = [1, 8, 1], strides = [1, 1, 1]} : vector<8x8x1xf32> to vector<1x8x1xf32>
    %295 = vector.shape_cast %294 : vector<1x8x1xf32> to vector<8x1xf32>
    %296 = arith.addf %293, %295 : vector<8x1xf32>
    %297 = vector.extract_strided_slice %291 {offsets = [2, 0, 0], sizes = [1, 8, 1], strides = [1, 1, 1]} : vector<8x8x1xf32> to vector<1x8x1xf32>
    %298 = vector.shape_cast %297 : vector<1x8x1xf32> to vector<8x1xf32>
    %299 = arith.addf %296, %298 : vector<8x1xf32>
    %300 = vector.extract_strided_slice %291 {offsets = [3, 0, 0], sizes = [1, 8, 1], strides = [1, 1, 1]} : vector<8x8x1xf32> to vector<1x8x1xf32>
    %301 = vector.shape_cast %300 : vector<1x8x1xf32> to vector<8x1xf32>
    %302 = arith.addf %299, %301 : vector<8x1xf32>
    %303 = vector.extract_strided_slice %291 {offsets = [4, 0, 0], sizes = [1, 8, 1], strides = [1, 1, 1]} : vector<8x8x1xf32> to vector<1x8x1xf32>
    %304 = vector.shape_cast %303 : vector<1x8x1xf32> to vector<8x1xf32>
    %305 = arith.addf %302, %304 : vector<8x1xf32>
    %306 = vector.extract_strided_slice %291 {offsets = [5, 0, 0], sizes = [1, 8, 1], strides = [1, 1, 1]} : vector<8x8x1xf32> to vector<1x8x1xf32>
    %307 = vector.shape_cast %306 : vector<1x8x1xf32> to vector<8x1xf32>
    %308 = arith.addf %305, %307 : vector<8x1xf32>
    %309 = vector.extract_strided_slice %291 {offsets = [6, 0, 0], sizes = [1, 8, 1], strides = [1, 1, 1]} : vector<8x8x1xf32> to vector<1x8x1xf32>
    %310 = vector.shape_cast %309 : vector<1x8x1xf32> to vector<8x1xf32>
    %311 = arith.addf %308, %310 : vector<8x1xf32>
    %312 = vector.extract_strided_slice %291 {offsets = [7, 0, 0], sizes = [1, 8, 1], strides = [1, 1, 1]} : vector<8x8x1xf32> to vector<1x8x1xf32>
    %313 = vector.shape_cast %312 : vector<1x8x1xf32> to vector<8x1xf32>
    %314 = arith.addf %311, %313 : vector<8x1xf32>
    %315 = vector.shape_cast %293 : vector<8x1xf32> to vector<1x8x1xf32>
    %316 = vector.shape_cast %296 : vector<8x1xf32> to vector<1x8x1xf32>
    %317 = vector.shape_cast %299 : vector<8x1xf32> to vector<1x8x1xf32>
    %318 = vector.shape_cast %302 : vector<8x1xf32> to vector<1x8x1xf32>
    %319 = vector.shape_cast %305 : vector<8x1xf32> to vector<1x8x1xf32>
    %320 = vector.shape_cast %308 : vector<8x1xf32> to vector<1x8x1xf32>
    %321 = vector.shape_cast %311 : vector<8x1xf32> to vector<1x8x1xf32>
    %322 = vector.shape_cast %314 : vector<8x1xf32> to vector<1x8x1xf32>
    %323 = tpu.concatenate %315, %316, %317, %318, %319, %320, %321, %322 in 0 : vector<1x8x1xf32>, vector<1x8x1xf32>, vector<1x8x1xf32>, vector<1x8x1xf32>, vector<1x8x1xf32>, vector<1x8x1xf32>, vector<1x8x1xf32>, vector<1x8x1xf32> -> vector<8x8x1xf32>
    %324 = vector.broadcast %323 : vector<8x8x1xf32> to vector<8x8x32xf32>
    %325 = arith.mulf %258, %324 : vector<8x8x32xf32>
    %326 = vector.shape_cast %325 : vector<8x8x32xf32> to vector<64x32xf32>
    %c0_103 = arith.constant 0 : index
    %c0_104 = arith.constant 0 : index
    %327 = vector.load %arg12[%c0_103, %c0_104] : memref<32x128xf32, #tpu.memory_space<vmem>>, vector<32x128xf32>
    %cst_105 = arith.constant dense<0.000000e+00> : vector<64x128xf32>
    %328 = tpu.matmul %326, %327, %cst_105 {dimension_numbers = #tpu.dot_dimension_numbers<[1], [0], [0], [1], [0, 0, 1, 1], [], []>} : vector<64x32xf32>, vector<32x128xf32>, vector<64x128xf32> -> vector<64x128xf32>
    %c0_106 = arith.constant 0 : index
    %c0_107 = arith.constant 0 : index
    %329 = vector.load %arg13[%c0_106, %c0_107] : memref<1x128xf32, #tpu.memory_space<vmem>>, vector<1x128xf32>
    %330 = vector.broadcast %329 : vector<1x128xf32> to vector<64x128xf32>
    %331 = arith.addf %328, %330 : vector<64x128xf32>
    %332 = vector.shape_cast %331 : vector<64x128xf32> to vector<8x8x128xf32>
    %c0_108 = arith.constant 0 : index
    %c0_109 = arith.constant 0 : index
    %c0_110 = arith.constant 0 : index
    %333 = vector.load %arg14[%c0_108, %c0_109, %c0_110] : memref<8x8x128xf32, #tpu.memory_space<vmem>>, vector<8x8x128xf32>
    tpu.vector_store %arg14[%c0_108, %c0_109, %c0_110], %332 {strides = array<i32>} : memref<8x8x128xf32, #tpu.memory_space<vmem>>, vector<8x8x128xf32>,
    return
  }
  func.func @transform_0(%arg0: i32, %arg1: memref<4xf32, #tpu.memory_space<smem>>) -> (i32, i32, i32) {
    %c0_i32 = arith.constant 0 : i32
    %c0_i32_0 = arith.constant 0 : i32
    %c0_i32_1 = arith.constant 0 : i32
    return %c0_i32, %arg0, %c0_i32_0 : i32, i32, i32
  }
  func.func @transform_1(%arg0: i32, %arg1: memref<4xf32, #tpu.memory_space<smem>>) -> (i32, i32) {
    %c0_i32 = arith.constant 0 : i32
    %c0_i32_0 = arith.constant 0 : i32
    %c0_i32_1 = arith.constant 0 : i32
    return %c0_i32, %c0_i32_0 : i32, i32
  }
  func.func @transform_2(%arg0: i32, %arg1: memref<4xf32, #tpu.memory_space<smem>>) -> (i32, i32) {
    %c0_i32 = arith.constant 0 : i32
    %c0_i32_0 = arith.constant 0 : i32
    %c0_i32_1 = arith.constant 0 : i32
    return %c0_i32, %c0_i32_0 : i32, i32
  }
  func.func @transform_3(%arg0: i32, %arg1: memref<4xf32, #tpu.memory_space<smem>>) -> (i32, i32) {
    %c0_i32 = arith.constant 0 : i32
    %c0_i32_0 = arith.constant 0 : i32
    %c0_i32_1 = arith.constant 0 : i32
    return %c0_i32, %c0_i32_0 : i32, i32
  }
  func.func @transform_4(%arg0: i32, %arg1: memref<4xf32, #tpu.memory_space<smem>>) -> (i32, i32) {
    %c0_i32 = arith.constant 0 : i32
    %c0_i32_0 = arith.constant 0 : i32
    %c0_i32_1 = arith.constant 0 : i32
    return %c0_i32, %c0_i32_0 : i32, i32
  }
  func.func @transform_5(%arg0: i32, %arg1: memref<4xf32, #tpu.memory_space<smem>>) -> (i32, i32) {
    %c0_i32 = arith.constant 0 : i32
    %c0_i32_0 = arith.constant 0 : i32
    %c0_i32_1 = arith.constant 0 : i32
    return %c0_i32, %c0_i32_0 : i32, i32
  }
  func.func @transform_6(%arg0: i32, %arg1: memref<4xf32, #tpu.memory_space<smem>>) -> (i32, i32) {
    %c0_i32 = arith.constant 0 : i32
    %c0_i32_0 = arith.constant 0 : i32
    %c0_i32_1 = arith.constant 0 : i32
    return %c0_i32, %c0_i32_0 : i32, i32
  }
  func.func @transform_7(%arg0: i32, %arg1: memref<4xf32, #tpu.memory_space<smem>>) -> (i32, i32) {
    %c0_i32 = arith.constant 0 : i32
    %c0_i32_0 = arith.constant 0 : i32
    %c0_i32_1 = arith.constant 0 : i32
    return %c0_i32, %c0_i32_0 : i32, i32
  }
  func.func @transform_8(%arg0: i32, %arg1: memref<4xf32, #tpu.memory_space<smem>>) -> (i32, i32) {
    %c0_i32 = arith.constant 0 : i32
    %c0_i32_0 = arith.constant 0 : i32
    %c0_i32_1 = arith.constant 0 : i32
    return %c0_i32, %c0_i32_0 : i32, i32
  }
  func.func @transform_9(%arg0: i32, %arg1: memref<4xf32, #tpu.memory_space<smem>>) -> (i32, i32) {
    %c0_i32 = arith.constant 0 : i32
    %c0_i32_0 = arith.constant 0 : i32
    %c0_i32_1 = arith.constant 0 : i32
    return %c0_i32, %c0_i32_0 : i32, i32
  }
  func.func @transform_10(%arg0: i32, %arg1: memref<4xf32, #tpu.memory_space<smem>>) -> (i32, i32) {
    %c0_i32 = arith.constant 0 : i32
    %c0_i32_0 = arith.constant 0 : i32
    %c0_i32_1 = arith.constant 0 : i32
    return %c0_i32, %c0_i32_0 : i32, i32
  }
  func.func @transform_11(%arg0: i32, %arg1: memref<4xf32, #tpu.memory_space<smem>>) -> (i32, i32) {
    %c0_i32 = arith.constant 0 : i32
    %c0_i32_0 = arith.constant 0 : i32
    %c0_i32_1 = arith.constant 0 : i32
    return %c0_i32, %c0_i32_0 : i32, i32
  }
  func.func @transform_12(%arg0: i32, %arg1: memref<4xf32, #tpu.memory_space<smem>>) -> (i32, i32, i32) {
    %c0_i32 = arith.constant 0 : i32
    %c0_i32_0 = arith.constant 0 : i32
    %c0_i32_1 = arith.constant 0 : i32
    return %c0_i32, %arg0, %c0_i32_0 : i32, i32, i32
  }
}

</mosaic_0001>

<llo_original>
// kernel: tpu_custom_call.1
$region0: #{tpu_custom_call.1}
  #allocation0 [shape = 'u32[]', space=smem, size = 0x4, offset = 0x4, fixed_abs, tag = 'smem constant byte address 0x4 - core index']
  #allocation1 [shape = 'u32[144,128]{1,0:T(1,128)}', space=vmem, size = 0x12000, scoped, tag = 'internal scratch']
  #allocation2 [shape = 'f32[8,8,128]{2,1,0:T(8,128)}', space=vmem, size = 0x8000, scoped, tag = 'scratch operand']
  #allocation3 [shape = 'f32[8,8,32]{2,1,0:T(8,128)}', space=vmem, size = 0x8000, scoped, tag = 'scratch operand']
  #allocation4 [shape = 's32[1]{0}', space=sflag, size = 0x4, scoped, tag = 'scoped memory for tpu_custom_call.1']
  #allocation5 [shape = 'u8[512]{0}', space=smem, size = 0x200, scoped, tag = 'prefetched SMEM operand 0']
  %s0 = inlined_call_operand.vmem [shape: f32[4], index: 0, kind: input, shape index: {}]
  %s1 = inlined_call_operand.vmem [shape: f32[8,8,32], index: 1, kind: input, shape index: {}]
  %s2 = inlined_call_operand.vmem [shape: f32[32,1], index: 2, kind: input, shape index: {}]
  %s3 = inlined_call_operand.vmem [shape: f32[32,1], index: 3, kind: input, shape index: {}]
  %s4 = inlined_call_operand.vmem [shape: f32[32,1], index: 4, kind: input, shape index: {}]
  %s5 = inlined_call_operand.vmem [shape: f32[32,1], index: 5, kind: input, shape index: {}]
  %s6 = inlined_call_operand.vmem [shape: f32[32,1], index: 6, kind: input, shape index: {}]
  %s7 = inlined_call_operand.vmem [shape: f32[32,1], index: 7, kind: input, shape index: {}]
  %s8 = inlined_call_operand.vmem [shape: f32[32,128], index: 8, kind: input, shape index: {}]
  %s9 = inlined_call_operand.vmem [shape: f32[32,128], index: 9, kind: input, shape index: {}]
  %s10 = inlined_call_operand.vmem [shape: f32[1,128], index: 10, kind: input, shape index: {}]
  %s11 = inlined_call_operand.vmem [shape: f32[32,128], index: 11, kind: input, shape index: {}]
  %s12 = inlined_call_operand.vmem [shape: f32[1,128], index: 12, kind: input, shape index: {}]
  %s13 = inlined_call_operand.hbm [shape: f32[8,8,128], index: 13, kind: output, shape index: {}]
  %s14 = sld [smem:[#allocation0]]
  $region58: #{tpu_custom_call.1} parent=0
    _
  %s16 = ssub.s32 1, %s14
  %s17 = scalar_select 0, %s16, %s14
  %s18 = sshll.u32 %s0, 4
  %s19 = int_to_ptr.vmem [resolvable:$true] %s18
  %21 = dma.vmem_to_smem %s19, 16, [#allocation5], [#allocation4]
  %22 = dma.done [#allocation4], 16
  %23 = sfence
  $region1: #{tpu_custom_call.1} parent=0
    #allocation6 [shape = 'u8[32768]{0}', space=vmem, size = 0x8000, scoped, tag = 'output window, operand 0, single buffered']
    #allocation7 [shape = 's32[1]{0}', space=sflag, size = 0x4, scoped, tag = 'scoped memory for tpu_custom_call.1']
    %24 = vsyncpa [#allocation7], 0
    // Predicated region
    $region2: #{tpu_custom_call.1} parent=1 // pred_check
      _
    $region3: #{tpu_custom_call.1} parent=1 // pred_check_branch
      %26 = sbr.rel (0) target = $region5
    $region4: #{tpu_custom_call.1} parent=1 // pred_region
      _
    $region5: #{tpu_custom_call.1} parent=1 // pred_fallthru
      _
    // Predicated region
    $region6: #{tpu_custom_call.1} parent=1 // pred_check
      _
    $region7: #{tpu_custom_call.1} parent=1 // pred_check_branch
      %28 = sbr.rel (0) target = $region9
    $region8: #{tpu_custom_call.1} parent=1 // pred_region
      _
    $region9: #{tpu_custom_call.1} parent=1 // pred_fallthru
      _
    // Predicated region
    $region10: #{tpu_custom_call.1} parent=1 // pred_check
      _
    $region11: #{tpu_custom_call.1} parent=1 // pred_check_branch
      %30 = sbr.rel (0) target = $region13
    $region12: #{tpu_custom_call.1} parent=1 // pred_region
      _
    $region13: #{tpu_custom_call.1} parent=1 // pred_fallthru
      _
    // Predicated region
    $region14: #{tpu_custom_call.1} parent=1 // pred_check
      _
    $region15: #{tpu_custom_call.1} parent=1 // pred_check_branch
      %32 = sbr.rel (0) target = $region17
    $region16: #{tpu_custom_call.1} parent=1 // pred_region
      _
    $region17: #{tpu_custom_call.1} parent=1 // pred_fallthru
      _
    // Predicated region
    $region18: #{tpu_custom_call.1} parent=1 // pred_check
      _
    $region19: #{tpu_custom_call.1} parent=1 // pred_check_branch
      %34 = sbr.rel (0) target = $region21
    $region20: #{tpu_custom_call.1} parent=1 // pred_region
      _
    $region21: #{tpu_custom_call.1} parent=1 // pred_fallthru
      _
    // Predicated region
    $region22: #{tpu_custom_call.1} parent=1 // pred_check
      _
    $region23: #{tpu_custom_call.1} parent=1 // pred_check_branch
      %36 = sbr.rel (0) target = $region25
    $region24: #{tpu_custom_call.1} parent=1 // pred_region
      _
    $region25: #{tpu_custom_call.1} parent=1 // pred_fallthru
      _
    // Predicated region
    $region26: #{tpu_custom_call.1} parent=1 // pred_check
      _
    $region27: #{tpu_custom_call.1} parent=1 // pred_check_branch
      %38 = sbr.rel (0) target = $region29
    $region28: #{tpu_custom_call.1} parent=1 // pred_region
      _
    $region29: #{tpu_custom_call.1} parent=1 // pred_fallthru
      _
    // Predicated region
    $region30: #{tpu_custom_call.1} parent=1 // pred_check
      _
    $region31: #{tpu_custom_call.1} parent=1 // pred_check_branch
      %40 = sbr.rel (0) target = $region33
    $region32: #{tpu_custom_call.1} parent=1 // pred_region
      _
    $region33: #{tpu_custom_call.1} parent=1 // pred_fallthru
      _
    // Predicated region
    $region34: #{tpu_custom_call.1} parent=1 // pred_check
      _
    $region35: #{tpu_custom_call.1} parent=1 // pred_check_branch
      %42 = sbr.rel (0) target = $region37
    $region36: #{tpu_custom_call.1} parent=1 // pred_region
      _
    $region37: #{tpu_custom_call.1} parent=1 // pred_fallthru
      _
    // Predicated region
    $region38: #{tpu_custom_call.1} parent=1 // pred_check
      _
    $region39: #{tpu_custom_call.1} parent=1 // pred_check_branch
      %44 = sbr.rel (0) target = $region41
    $region40: #{tpu_custom_call.1} parent=1 // pred_region
      _
    $region41: #{tpu_custom_call.1} parent=1 // pred_fallthru
      _
    // Predicated region
    $region42: #{tpu_custom_call.1} parent=1 // pred_check
      _
    $region43: #{tpu_custom_call.1} parent=1 // pred_check_branch
      %46 = sbr.rel (0) target = $region45
    $region44: #{tpu_custom_call.1} parent=1 // pred_region
      _
    $region45: #{tpu_custom_call.1} parent=1 // pred_fallthru
      _
    // Predicated region
    $region46: #{tpu_custom_call.1} parent=1 // pred_check
      _
    $region47: #{tpu_custom_call.1} parent=1 // pred_check_branch
      %48 = sbr.rel (0) target = $region49
    $region48: #{tpu_custom_call.1} parent=1 // pred_region
      _
    $region49: #{tpu_custom_call.1} parent=1 // pred_fallthru
      _
    %s49 = sld [smem:[#allocation5]]
    %s50 = sld [smem:[#allocation5 + $0x1]]
    %s51 = sld [smem:[#allocation5 + $0x2]]
    %s52 = sld [smem:[#allocation5 + $0x3]]
    %v53 = vld [vmem:[%s1] sm:$0xff]
    %v54 = vld [vmem:[%s1 + $0x8] sm:$0xff]
    %v55 = vld [vmem:[%s1 + $0x10] sm:$0xff]
    %v56 = vld [vmem:[%s1 + $0x18] sm:$0xff]
    %v57 = vld [vmem:[%s1 + $0x20] sm:$0xff]
    %v58 = vld [vmem:[%s1 + $0x28] sm:$0xff]
    %v59 = vld [vmem:[%s1 + $0x30] sm:$0xff]
    %v60 = vld [vmem:[%s1 + $0x38] sm:$0xff]
    %v61 = vld [vmem:[%s2] sm:$0xff]
    %v62 = vld [vmem:[%s2 + $0x8] sm:$0xff]
    %v63 = vld [vmem:[%s2 + $0x10] sm:$0xff]
    %v64 = vld [vmem:[%s2 + $0x18] sm:$0xff]
    %v65 = vstv %s49
    %vm66 = vcmask 261120
    %v68 = vsel %vm66, %v53, 0
    %v71 = vsel %vm66, %v54, 0
    %v74 = vsel %vm66, %v55, 0
    %v77 = vsel %vm66, %v56, 0
    %v80 = vsel %vm66, %v57, 0
    %v83 = vsel %vm66, %v58, 0
    %v86 = vsel %vm66, %v59, 0
    %v89 = vsel %vm66, %v60, 0
    %91 = vmatprep.subr.mxu0 0.0
    %92 = vmatpush1.msra.mxu0 %v61
    %93 = vmatprep.subr.mxu0 0.0
    %94 = vmatpush1.msra.mxu0 %v62
    %95 = vmatprep.subr.mxu0 0.0
    %96 = vmatpush1.msra.mxu0 %v63
    %97 = vmatprep.subr.mxu0 0.0
    %98 = vmatpush1.msra.mxu0 %v64
    %99 = vmatprep.subr.mxu0 0.0
    %100 = vmatpush1.msra.mxu0 0.0
    %101 = vmatprep.subr.mxu0 0.0
    %102 = vmatpush1.msra.mxu0 0.0
    %103 = vmatprep.subr.mxu0 0.0
    %104 = vmatpush1.msra.mxu0 0.0
    %105 = vmatprep.subr.mxu0 0.0
    %106 = vmatpush1.msra.mxu0 0.0
    %107 = vmatprep.subr.mxu0 0.0
    %108 = vmatpush1.msra.mxu0 0.0
    %109 = vmatprep.subr.mxu0 0.0
    %110 = vmatpush1.msra.mxu0 0.0
    %111 = vmatprep.subr.mxu0 0.0
    %112 = vmatpush1.msra.mxu0 0.0
    %113 = vmatprep.subr.mxu0 0.0
    %114 = vmatpush1.msra.mxu0 0.0
    %115 = vmatprep.subr.mxu0 0.0
    %116 = vmatpush1.msra.mxu0 0.0
    %117 = vmatprep.subr.mxu0 0.0
    %118 = vmatpush1.msra.mxu0 0.0
    %119 = vmatprep.subr.mxu0 0.0
    %120 = vmatpush1.msra.mxu0 0.0
    %121 = vmatprep.subr.mxu0 0.0
    %122 = vmatpush1.msra.mxu0 0.0
    %123 = vmatprep.subr.mxu0 0.0
    %124 = vmatpush1.msra.mxu0 0.0
    %125 = vmatprep.subr.mxu0 0.0
    %126 = vmatpush1.msra.mxu0 0.0
    %127 = vmatprep.subr.mxu0 0.0
    %128 = vmatpush1.msra.mxu0 0.0
    %129 = vmatprep.subr.mxu0 0.0
    %130 = vmatpush1.msra.mxu0 0.0
    %131 = vmatprep.subr.mxu0 0.0
    %132 = vmatpush1.msra.mxu0 0.0
    %133 = vmatprep.subr.mxu0 0.0
    %134 = vmatpush1.msra.mxu0 0.0
    %135 = vmatprep.subr.mxu0 0.0
    %136 = vmatpush1.msra.mxu0 0.0
    %137 = vmatprep.subr.mxu0 0.0
    %138 = vmatpush1.msra.mxu0 0.0
    %139 = vmatprep.subr.mxu0 0.0
    %140 = vmatpush1.msra.mxu0 0.0
    %141 = vmatprep.subr.mxu0 0.0
    %142 = vmatpush1.msra.mxu0 0.0
    %143 = vmatprep.subr.mxu0 0.0
    %144 = vmatpush1.msra.mxu0 0.0
    %145 = vmatprep.subr.mxu0 0.0
    %146 = vmatpush1.msra.mxu0 0.0
    %147 = vmatprep.subr.mxu0 0.0
    %148 = vmatpush1.msra.mxu0 0.0
    %149 = vmatprep.subr.mxu0 0.0
    %150 = vmatpush1.msra.mxu0 0.0
    %151 = vmatprep.subr.mxu0 0.0
    %152 = vmatpush1.msra.mxu0 0.0
    %153 = vmatprep.subr.mxu0 0.0
    %154 = vmatpush1.msra.mxu0 0.0
    %155 = vmatprep.mubr.f32.mxu0 0.0
    %156 = vmatmul.mubr.f32.gmra.mrb[0].mxu0 %v68
    %v157 = vpop.f32.mrb[0].mxu0
    %v158 = vadd.f32 %v65, %v157
    %v159 = vpop.f32.mrb[0].mxu0
    %160 = vmatprep.mubr.f32.mxu0 0.0
    %161 = vmatmul.mubr.f32.gmra.mrb[0].mxu0 %v71
    %v162 = vpop.f32.mrb[0].mxu0
    %v163 = vadd.f32 %v65, %v162
    %v164 = vpop.f32.mrb[0].mxu0
    %165 = vmatprep.mubr.f32.mxu0 0.0
    %166 = vmatmul.mubr.f32.gmra.mrb[0].mxu0 %v74
    %v167 = vpop.f32.mrb[0].mxu0
    %v168 = vadd.f32 %v65, %v167
    %v169 = vpop.f32.mrb[0].mxu0
    %170 = vmatprep.mubr.f32.mxu0 0.0
    %171 = vmatmul.mubr.f32.gmra.mrb[0].mxu0 %v77
    %v172 = vpop.f32.mrb[0].mxu0
    %v173 = vadd.f32 %v65, %v172
    %v174 = vpop.f32.mrb[0].mxu0
    %175 = vmatprep.mubr.f32.mxu0 0.0
    %176 = vmatmul.mubr.f32.gmra.mrb[0].mxu0 %v80
    %v177 = vpop.f32.mrb[0].mxu0
    %v178 = vadd.f32 %v65, %v177
    %v179 = vpop.f32.mrb[0].mxu0
    %180 = vmatprep.mubr.f32.mxu0 0.0
    %181 = vmatmul.mubr.f32.gmra.mrb[0].mxu0 %v83
    %v182 = vpop.f32.mrb[0].mxu0
    %v183 = vadd.f32 %v65, %v182
    %v184 = vpop.f32.mrb[0].mxu0
    %185 = vmatprep.mubr.f32.mxu0 0.0
    %186 = vmatmul.mubr.f32.gmra.mrb[0].mxu0 %v86
    %v187 = vpop.f32.mrb[0].mxu0
    %v188 = vadd.f32 %v65, %v187
    %v189 = vpop.f32.mrb[0].mxu0
    %190 = vmatprep.mubr.f32.mxu0 0.0
    %191 = vmatmul.mubr.f32.gmra.mrb[0].mxu0 %v89
    %v192 = vpop.f32.mrb[0].mxu0
    %v193 = vadd.f32 %v65, %v192
    %v194 = vpop.f32.mrb[0].mxu0
    %195 = vdwg.mxu0
    %v196 = vxor.u32 %v158, 2147483648
    %v197 = vxor.u32 %v163, 2147483648
    %v198 = vxor.u32 %v168, 2147483648
    %v199 = vxor.u32 %v173, 2147483648
    %v200 = vxor.u32 %v178, 2147483648
    %v201 = vxor.u32 %v183, 2147483648
    %v202 = vxor.u32 %v188, 2147483648
    %v203 = vxor.u32 %v193, 2147483648
    %v204 = vmul.f32 %v196, 1.442695
    %v205 = vpow.pop %v204
    %v206 = vmul.f32 %v197, 1.442695
    %v207 = vpow.pop %v206
    %v208 = vmul.f32 %v198, 1.442695
    %v209 = vpow.pop %v208
    %v210 = vmul.f32 %v199, 1.442695
    %v211 = vpow.pop %v210
    %v212 = vmul.f32 %v200, 1.442695
    %v213 = vpow.pop %v212
    %v214 = vmul.f32 %v201, 1.442695
    %v215 = vpow.pop %v214
    %v216 = vmul.f32 %v202, 1.442695
    %v217 = vpow.pop %v216
    %v218 = vmul.f32 %v203, 1.442695
    %v219 = vpow.pop %v218
    %v220 = vadd.f32 %v205, 1.0
    %v221 = vadd.f32 %v207, 1.0
    %v222 = vadd.f32 %v209, 1.0
    %v223 = vadd.f32 %v211, 1.0
    %v224 = vadd.f32 %v213, 1.0
    %v225 = vadd.f32 %v215, 1.0
    %v226 = vadd.f32 %v217, 1.0
    %v227 = vadd.f32 %v219, 1.0
    %v228 = vrcp.pop %v220
    %v229 = vmul.f32 1.0, %v228
    %v230 = vrcp.pop %v221
    %v231 = vmul.f32 1.0, %v230
    %v232 = vrcp.pop %v222
    %v233 = vmul.f32 1.0, %v232
    %v234 = vrcp.pop %v223
    %v235 = vmul.f32 1.0, %v234
    %v236 = vrcp.pop %v224
    %v237 = vmul.f32 1.0, %v236
    %v238 = vrcp.pop %v225
    %v239 = vmul.f32 1.0, %v238
    %v240 = vrcp.pop %v226
    %v241 = vmul.f32 1.0, %v240
    %v242 = vrcp.pop %v227
    %v243 = vmul.f32 1.0, %v242
    %245 = vset.pattern.permute.xlu0 0
    %246 = vperm.xlu0 %245, %v229
    %v247 = vpop.permute.xlu0 %246
    %250 = vset.pattern.permute.xlu0 0
    %251 = vperm.xlu0 %250, %v231
    %v252 = vpop.permute.xlu0 %251
    %255 = vset.pattern.permute.xlu0 0
    %256 = vperm.xlu0 %255, %v233
    %v257 = vpop.permute.xlu0 %256
    %260 = vset.pattern.permute.xlu0 0
    %261 = vperm.xlu0 %260, %v235
    %v262 = vpop.permute.xlu0 %261
    %265 = vset.pattern.permute.xlu0 0
    %266 = vperm.xlu0 %265, %v237
    %v267 = vpop.permute.xlu0 %266
    %270 = vset.pattern.permute.xlu0 0
    %271 = vperm.xlu0 %270, %v239
    %v272 = vpop.permute.xlu0 %271
    %275 = vset.pattern.permute.xlu0 0
    %276 = vperm.xlu0 %275, %v241
    %v277 = vpop.permute.xlu0 %276
    %280 = vset.pattern.permute.xlu0 0
    %281 = vperm.xlu0 %280, %v243
    %v282 = vpop.permute.xlu0 %281
    %v284 = vmul.f32 %v53, %v247
    %v285 = vmul.f32 %v54, %v252
    %v286 = vmul.f32 %v55, %v257
    %v287 = vmul.f32 %v56, %v262
    %v288 = vmul.f32 %v57, %v267
    %v289 = vmul.f32 %v58, %v272
    %v290 = vmul.f32 %v59, %v277
    %v291 = vmul.f32 %v60, %v282
    %v292 = vsel %vm66, %v284, 0.0
    %v293 = vsel %vm66, %v285, 0.0
    %v294 = vadd.f32 %v292, %v293
    %v295 = vsel %vm66, %v286, 0.0
    %v296 = vadd.f32 %v294, %v295
    %v297 = vsel %vm66, %v287, 0.0
    %v298 = vadd.f32 %v296, %v297
    %v299 = vsel %vm66, %v288, 0.0
    %v300 = vadd.f32 %v298, %v299
    %v301 = vsel %vm66, %v289, 0.0
    %v302 = vadd.f32 %v300, %v301
    %v303 = vsel %vm66, %v290, 0.0
    %v304 = vadd.f32 %v302, %v303
    %v305 = vsel %vm66, %v291, 0.0
    %v306 = vadd.f32 %v304, %v305
    %vm307 = vcmask 7168
    %v308 = vsel %vm307, %v229, 0.0
    %v309 = vsel %vm307, %v231, 0.0
    %v310 = vadd.f32 %v308, %v309
    %v311 = vsel %vm307, %v233, 0.0
    %v312 = vadd.f32 %v310, %v311
    %v313 = vsel %vm307, %v235, 0.0
    %v314 = vadd.f32 %v312, %v313
    %v315 = vsel %vm307, %v237, 0.0
    %v316 = vadd.f32 %v314, %v315
    %v317 = vsel %vm307, %v239, 0.0
    %v318 = vadd.f32 %v316, %v317
    %v319 = vsel %vm307, %v241, 0.0
    %v320 = vadd.f32 %v318, %v319
    %v321 = vsel %vm307, %v243, 0.0
    %v322 = vadd.f32 %v320, %v321
    %324 = vset.pattern.permute.xlu0 0
    %325 = vperm.xlu0 %324, %v322
    %v326 = vpop.permute.xlu0 %325
    %v328 = vrcp.pop %v326
    %v329 = vmul.f32 %v306, %v328
    %v330 = vld [vmem:[%s3] sm:$0xff]
    %v331 = vld [vmem:[%s3 + $0x8] sm:$0xff]
    %v332 = vld [vmem:[%s3 + $0x10] sm:$0xff]
    %v333 = vld [vmem:[%s3 + $0x18] sm:$0xff]
    %334 = vmatprep.subr.mxu0 0.0
    %335 = vmatpush1.msra.mxu0 %v330
    %336 = vmatprep.subr.mxu0 0.0
    %337 = vmatpush1.msra.mxu0 %v331
    %338 = vmatprep.subr.mxu0 0.0
    %339 = vmatpush1.msra.mxu0 %v332
    %340 = vmatprep.subr.mxu0 0.0
    %341 = vmatpush1.msra.mxu0 %v333
    %342 = vmatprep.subr.mxu0 0.0
    %343 = vmatpush1.msra.mxu0 0.0
    %344 = vmatprep.subr.mxu0 0.0
    %345 = vmatpush1.msra.mxu0 0.0
    %346 = vmatprep.subr.mxu0 0.0
    %347 = vmatpush1.msra.mxu0 0.0
    %348 = vmatprep.subr.mxu0 0.0
    %349 = vmatpush1.msra.mxu0 0.0
    %350 = vmatprep.subr.mxu0 0.0
    %351 = vmatpush1.msra.mxu0 0.0
    %352 = vmatprep.subr.mxu0 0.0
    %353 = vmatpush1.msra.mxu0 0.0
    %354 = vmatprep.subr.mxu0 0.0
    %355 = vmatpush1.msra.mxu0 0.0
    %356 = vmatprep.subr.mxu0 0.0
    %357 = vmatpush1.msra.mxu0 0.0
    %358 = vmatprep.subr.mxu0 0.0
    %359 = vmatpush1.msra.mxu0 0.0
    %360 = vmatprep.subr.mxu0 0.0
    %361 = vmatpush1.msra.mxu0 0.0
    %362 = vmatprep.subr.mxu0 0.0
    %363 = vmatpush1.msra.mxu0 0.0
    %364 = vmatprep.subr.mxu0 0.0
    %365 = vmatpush1.msra.mxu0 0.0
    %366 = vmatprep.subr.mxu0 0.0
    %367 = vmatpush1.msra.mxu0 0.0
    %368 = vmatprep.subr.mxu0 0.0
    %369 = vmatpush1.msra.mxu0 0.0
    %370 = vmatprep.subr.mxu0 0.0
    %371 = vmatpush1.msra.mxu0 0.0
    %372 = vmatprep.subr.mxu0 0.0
    %373 = vmatpush1.msra.mxu0 0.0
    %374 = vmatprep.subr.mxu0 0.0
    %375 = vmatpush1.msra.mxu0 0.0
    %376 = vmatprep.subr.mxu0 0.0
    %377 = vmatpush1.msra.mxu0 0.0
    %378 = vmatprep.subr.mxu0 0.0
    %379 = vmatpush1.msra.mxu0 0.0
    %380 = vmatprep.subr.mxu0 0.0
    %381 = vmatpush1.msra.mxu0 0.0
    %382 = vmatprep.subr.mxu0 0.0
    %383 = vmatpush1.msra.mxu0 0.0
    %384 = vmatprep.subr.mxu0 0.0
    %385 = vmatpush1.msra.mxu0 0.0
    %386 = vmatprep.subr.mxu0 0.0
    %387 = vmatpush1.msra.mxu0 0.0
    %388 = vmatprep.subr.mxu0 0.0
    %389 = vmatpush1.msra.mxu0 0.0
    %390 = vmatprep.subr.mxu0 0.0
    %391 = vmatpush1.msra.mxu0 0.0
    %392 = vmatprep.subr.mxu0 0.0
    %393 = vmatpush1.msra.mxu0 0.0
    %394 = vmatprep.subr.mxu0 0.0
    %395 = vmatpush1.msra.mxu0 0.0
    %396 = vmatprep.subr.mxu0 0.0
    %397 = vmatpush1.msra.mxu0 0.0
    %398 = vmatprep.mubr.f32.mxu0 0.0
    %399 = vmatmul.mubr.f32.gmra.mrb[0].mxu0 %v68
    %v400 = vpop.f32.mrb[0].mxu0
    %v401 = vadd.f32 0.0, %v400
    %v402 = vpop.f32.mrb[0].mxu0
    %403 = vmatprep.mubr.f32.mxu0 0.0
    %404 = vmatmul.mubr.f32.gmra.mrb[0].mxu0 %v71
    %v405 = vpop.f32.mrb[0].mxu0
    %v406 = vadd.f32 0.0, %v405
    %v407 = vpop.f32.mrb[0].mxu0
    %408 = vmatprep.mubr.f32.mxu0 0.0
    %409 = vmatmul.mubr.f32.gmra.mrb[0].mxu0 %v74
    %v410 = vpop.f32.mrb[0].mxu0
    %v411 = vadd.f32 0.0, %v410
    %v412 = vpop.f32.mrb[0].mxu0
    %413 = vmatprep.mubr.f32.mxu0 0.0
    %414 = vmatmul.mubr.f32.gmra.mrb[0].mxu0 %v77
    %v415 = vpop.f32.mrb[0].mxu0
    %v416 = vadd.f32 0.0, %v415
    %v417 = vpop.f32.mrb[0].mxu0
    %418 = vmatprep.mubr.f32.mxu0 0.0
    %419 = vmatmul.mubr.f32.gmra.mrb[0].mxu0 %v80
    %v420 = vpop.f32.mrb[0].mxu0
    %v421 = vadd.f32 0.0, %v420
    %v422 = vpop.f32.mrb[0].mxu0
    %423 = vmatprep.mubr.f32.mxu0 0.0
    %424 = vmatmul.mubr.f32.gmra.mrb[0].mxu0 %v83
    %v425 = vpop.f32.mrb[0].mxu0
    %v426 = vadd.f32 0.0, %v425
    %v427 = vpop.f32.mrb[0].mxu0
    %428 = vmatprep.mubr.f32.mxu0 0.0
    %429 = vmatmul.mubr.f32.gmra.mrb[0].mxu0 %v86
    %v430 = vpop.f32.mrb[0].mxu0
    %v431 = vadd.f32 0.0, %v430
    %v432 = vpop.f32.mrb[0].mxu0
    %433 = vmatprep.mubr.f32.mxu0 0.0
    %434 = vmatmul.mubr.f32.gmra.mrb[0].mxu0 %v89
    %v435 = vpop.f32.mrb[0].mxu0
    %v436 = vadd.f32 0.0, %v435
    %v437 = vpop.f32.mrb[0].mxu0
    %438 = vdwg.mxu0
    %v439 = vld [vmem:[%s4] sm:$0xff]
    %v440 = vld [vmem:[%s4 + $0x8] sm:$0xff]
    %v441 = vld [vmem:[%s4 + $0x10] sm:$0xff]
    %v442 = vld [vmem:[%s4 + $0x18] sm:$0xff]
    %v444 = vsel %vm66, %v329, 0
    %446 = vmatprep.subr.mxu0 0.0
    %447 = vmatpush1.msra.mxu0 %v439
    %448 = vmatprep.subr.mxu0 0.0
    %449 = vmatpush1.msra.mxu0 %v440
    %450 = vmatprep.subr.mxu0 0.0
    %451 = vmatpush1.msra.mxu0 %v441
    %452 = vmatprep.subr.mxu0 0.0
    %453 = vmatpush1.msra.mxu0 %v442
    %454 = vmatprep.subr.mxu0 0.0
    %455 = vmatpush1.msra.mxu0 0.0
    %456 = vmatprep.subr.mxu0 0.0
    %457 = vmatpush1.msra.mxu0 0.0
    %458 = vmatprep.subr.mxu0 0.0
    %459 = vmatpush1.msra.mxu0 0.0
    %460 = vmatprep.subr.mxu0 0.0
    %461 = vmatpush1.msra.mxu0 0.0
    %462 = vmatprep.subr.mxu0 0.0
    %463 = vmatpush1.msra.mxu0 0.0
    %464 = vmatprep.subr.mxu0 0.0
    %465 = vmatpush1.msra.mxu0 0.0
    %466 = vmatprep.subr.mxu0 0.0
    %467 = vmatpush1.msra.mxu0 0.0
    %468 = vmatprep.subr.mxu0 0.0
    %469 = vmatpush1.msra.mxu0 0.0
    %470 = vmatprep.subr.mxu0 0.0
    %471 = vmatpush1.msra.mxu0 0.0
    %472 = vmatprep.subr.mxu0 0.0
    %473 = vmatpush1.msra.mxu0 0.0
    %474 = vmatprep.subr.mxu0 0.0
    %475 = vmatpush1.msra.mxu0 0.0
    %476 = vmatprep.subr.mxu0 0.0
    %477 = vmatpush1.msra.mxu0 0.0
    %478 = vmatprep.subr.mxu0 0.0
    %479 = vmatpush1.msra.mxu0 0.0
    %480 = vmatprep.subr.mxu0 0.0
    %481 = vmatpush1.msra.mxu0 0.0
    %482 = vmatprep.subr.mxu0 0.0
    %483 = vmatpush1.msra.mxu0 0.0
    %484 = vmatprep.subr.mxu0 0.0
    %485 = vmatpush1.msra.mxu0 0.0
    %486 = vmatprep.subr.mxu0 0.0
    %487 = vmatpush1.msra.mxu0 0.0
    %488 = vmatprep.subr.mxu0 0.0
    %489 = vmatpush1.msra.mxu0 0.0
    %490 = vmatprep.subr.mxu0 0.0
    %491 = vmatpush1.msra.mxu0 0.0
    %492 = vmatprep.subr.mxu0 0.0
    %493 = vmatpush1.msra.mxu0 0.0
    %494 = vmatprep.subr.mxu0 0.0
    %495 = vmatpush1.msra.mxu0 0.0
    %496 = vmatprep.subr.mxu0 0.0
    %497 = vmatpush1.msra.mxu0 0.0
    %498 = vmatprep.subr.mxu0 0.0
    %499 = vmatpush1.msra.mxu0 0.0
    %500 = vmatprep.subr.mxu0 0.0
    %501 = vmatpush1.msra.mxu0 0.0
    %502 = vmatprep.subr.mxu0 0.0
    %503 = vmatpush1.msra.mxu0 0.0
    %504 = vmatprep.subr.mxu0 0.0
    %505 = vmatpush1.msra.mxu0 0.0
    %506 = vmatprep.subr.mxu0 0.0
    %507 = vmatpush1.msra.mxu0 0.0
    %508 = vmatprep.subr.mxu0 0.0
    %509 = vmatpush1.msra.mxu0 0.0
    %510 = vmatprep.mubr.f32.mxu0 0.0
    %511 = vmatmul.mubr.f32.gmra.mrb[0].mxu0 %v444
    %v512 = vpop.f32.mrb[0].mxu0
    %v513 = vadd.f32 0.0, %v512
    %v514 = vpop.f32.mrb[0].mxu0
    %515 = vdwg.mxu0
    %v516 = vadd.f32 %v401, %v513
    %v517 = vadd.f32 %v406, %v513
    %v518 = vadd.f32 %v411, %v513
    %v519 = vadd.f32 %v416, %v513
    %v520 = vadd.f32 %v421, %v513
    %v521 = vadd.f32 %v426, %v513
    %v522 = vadd.f32 %v431, %v513
    %v523 = vadd.f32 %v436, %v513
    %v524 = vstv %s50
    %v525 = vadd.f32 %v516, %v524
    %v526 = vadd.f32 %v517, %v524
    %v527 = vadd.f32 %v518, %v524
    %v528 = vadd.f32 %v519, %v524
    %v529 = vadd.f32 %v520, %v524
    %v530 = vadd.f32 %v521, %v524
    %v531 = vadd.f32 %v522, %v524
    %v532 = vadd.f32 %v523, %v524
    %v533 = vxor.u32 %v525, 2147483648
    %v534 = vxor.u32 %v526, 2147483648
    %v535 = vxor.u32 %v527, 2147483648
    %v536 = vxor.u32 %v528, 2147483648
    %v537 = vxor.u32 %v529, 2147483648
    %v538 = vxor.u32 %v530, 2147483648
    %v539 = vxor.u32 %v531, 2147483648
    %v540 = vxor.u32 %v532, 2147483648
    %v541 = vmul.f32 %v533, 1.442695
    %v542 = vpow.pop %v541
    %v543 = vmul.f32 %v534, 1.442695
    %v544 = vpow.pop %v543
    %v545 = vmul.f32 %v535, 1.442695
    %v546 = vpow.pop %v545
    %v547 = vmul.f32 %v536, 1.442695
    %v548 = vpow.pop %v547
    %v549 = vmul.f32 %v537, 1.442695
    %v550 = vpow.pop %v549
    %v551 = vmul.f32 %v538, 1.442695
    %v552 = vpow.pop %v551
    %v553 = vmul.f32 %v539, 1.442695
    %v554 = vpow.pop %v553
    %v555 = vmul.f32 %v540, 1.442695
    %v556 = vpow.pop %v555
    %v557 = vadd.f32 %v542, 1.0
    %v558 = vadd.f32 %v544, 1.0
    %v559 = vadd.f32 %v546, 1.0
    %v560 = vadd.f32 %v548, 1.0
    %v561 = vadd.f32 %v550, 1.0
    %v562 = vadd.f32 %v552, 1.0
    %v563 = vadd.f32 %v554, 1.0
    %v564 = vadd.f32 %v556, 1.0
    %v565 = vrcp.pop %v557
    %v566 = vmul.f32 1.0, %v565
    %v567 = vrcp.pop %v558
    %v568 = vmul.f32 1.0, %v567
    %v569 = vrcp.pop %v559
    %v570 = vmul.f32 1.0, %v569
    %v571 = vrcp.pop %v560
    %v572 = vmul.f32 1.0, %v571
    %v573 = vrcp.pop %v561
    %v574 = vmul.f32 1.0, %v573
    %v575 = vrcp.pop %v562
    %v576 = vmul.f32 1.0, %v575
    %v577 = vrcp.pop %v563
    %v578 = vmul.f32 1.0, %v577
    %v579 = vrcp.pop %v564
    %v580 = vmul.f32 1.0, %v579
    %v581 = vadd.f32 %v566, %v568
    %v582 = vadd.f32 %v581, %v570
    %v583 = vadd.f32 %v582, %v572
    %v584 = vadd.f32 %v583, %v574
    %v585 = vadd.f32 %v584, %v576
    %v586 = vadd.f32 %v585, %v578
    %v587 = vadd.f32 %v586, %v580
    %589 = vset.pattern.permute.xlu0 0
    %590 = vperm.xlu0 %589, %v566
    %v591 = vpop.permute.xlu0 %590
    %594 = vset.pattern.permute.xlu0 0
    %595 = vperm.xlu0 %594, %v581
    %v596 = vpop.permute.xlu0 %595
    %599 = vset.pattern.permute.xlu0 0
    %600 = vperm.xlu0 %599, %v582
    %v601 = vpop.permute.xlu0 %600
    %604 = vset.pattern.permute.xlu0 0
    %605 = vperm.xlu0 %604, %v583
    %v606 = vpop.permute.xlu0 %605
    %609 = vset.pattern.permute.xlu0 0
    %610 = vperm.xlu0 %609, %v584
    %v611 = vpop.permute.xlu0 %610
    %614 = vset.pattern.permute.xlu0 0
    %615 = vperm.xlu0 %614, %v585
    %v616 = vpop.permute.xlu0 %615
    %619 = vset.pattern.permute.xlu0 0
    %620 = vperm.xlu0 %619, %v586
    %v621 = vpop.permute.xlu0 %620
    %624 = vset.pattern.permute.xlu0 0
    %625 = vperm.xlu0 %624, %v587
    %v626 = vpop.permute.xlu0 %625
    %v628 = vmul.f32 %v53, %v591
    %v629 = vmul.f32 %v54, %v596
    %v630 = vmul.f32 %v55, %v601
    %v631 = vmul.f32 %v56, %v606
    %v632 = vmul.f32 %v57, %v611
    %v633 = vmul.f32 %v58, %v616
    %v634 = vmul.f32 %v59, %v621
    %v635 = vmul.f32 %v60, %v626
    %v636 = vld [vmem:[%s8] sm:$0xff]
    %v637 = vld [vmem:[%s8 + $0x8] sm:$0xff]
    %v638 = vld [vmem:[%s8 + $0x10] sm:$0xff]
    %v639 = vld [vmem:[%s8 + $0x18] sm:$0xff]
    %v640 = vld [vmem:[%s10] sm:$0x1]
    %v642 = vlaneseq
    %v643 = vshrl.u32 %v642, 7
    %v644 = vsub.s32 0, %v643
    %v645 = vrot.slane %v640, %v644
    %v648 = vsel %vm66, %v628, 0
    %v651 = vsel %vm66, %v629, 0
    %v654 = vsel %vm66, %v630, 0
    %v657 = vsel %vm66, %v631, 0
    %v660 = vsel %vm66, %v632, 0
    %v663 = vsel %vm66, %v633, 0
    %v666 = vsel %vm66, %v634, 0
    %v669 = vsel %vm66, %v635, 0
    %671 = vmatprep.subr.mxu0 0.0
    %672 = vmatpush1.msra.mxu0 %v636
    %673 = vmatprep.subr.mxu0 0.0
    %674 = vmatpush1.msra.mxu0 %v637
    %675 = vmatprep.subr.mxu0 0.0
    %676 = vmatpush1.msra.mxu0 %v638
    %677 = vmatprep.subr.mxu0 0.0
    %678 = vmatpush1.msra.mxu0 %v639
    %679 = vmatprep.subr.mxu0 0.0
    %680 = vmatpush1.msra.mxu0 0.0
    %681 = vmatprep.subr.mxu0 0.0
    %682 = vmatpush1.msra.mxu0 0.0
    %683 = vmatprep.subr.mxu0 0.0
    %684 = vmatpush1.msra.mxu0 0.0
    %685 = vmatprep.subr.mxu0 0.0
    %686 = vmatpush1.msra.mxu0 0.0
    %687 = vmatprep.subr.mxu0 0.0
    %688 = vmatpush1.msra.mxu0 0.0
    %689 = vmatprep.subr.mxu0 0.0
    %690 = vmatpush1.msra.mxu0 0.0
    %691 = vmatprep.subr.mxu0 0.0
    %692 = vmatpush1.msra.mxu0 0.0
    %693 = vmatprep.subr.mxu0 0.0
    %694 = vmatpush1.msra.mxu0 0.0
    %695 = vmatprep.subr.mxu0 0.0
    %696 = vmatpush1.msra.mxu0 0.0
    %697 = vmatprep.subr.mxu0 0.0
    %698 = vmatpush1.msra.mxu0 0.0
    %699 = vmatprep.subr.mxu0 0.0
    %700 = vmatpush1.msra.mxu0 0.0
    %701 = vmatprep.subr.mxu0 0.0
    %702 = vmatpush1.msra.mxu0 0.0
    %703 = vmatprep.subr.mxu0 0.0
    %704 = vmatpush1.msra.mxu0 0.0
    %705 = vmatprep.subr.mxu0 0.0
    %706 = vmatpush1.msra.mxu0 0.0
    %707 = vmatprep.subr.mxu0 0.0
    %708 = vmatpush1.msra.mxu0 0.0
    %709 = vmatprep.subr.mxu0 0.0
    %710 = vmatpush1.msra.mxu0 0.0
    %711 = vmatprep.subr.mxu0 0.0
    %712 = vmatpush1.msra.mxu0 0.0
    %713 = vmatprep.subr.mxu0 0.0
    %714 = vmatpush1.msra.mxu0 0.0
    %715 = vmatprep.subr.mxu0 0.0
    %716 = vmatpush1.msra.mxu0 0.0
    %717 = vmatprep.subr.mxu0 0.0
    %718 = vmatpush1.msra.mxu0 0.0
    %719 = vmatprep.subr.mxu0 0.0
    %720 = vmatpush1.msra.mxu0 0.0
    %721 = vmatprep.subr.mxu0 0.0
    %722 = vmatpush1.msra.mxu0 0.0
    %723 = vmatprep.subr.mxu0 0.0
    %724 = vmatpush1.msra.mxu0 0.0
    %725 = vmatprep.subr.mxu0 0.0
    %726 = vmatpush1.msra.mxu0 0.0
    %727 = vmatprep.subr.mxu0 0.0
    %728 = vmatpush1.msra.mxu0 0.0
    %729 = vmatprep.subr.mxu0 0.0
    %730 = vmatpush1.msra.mxu0 0.0
    %731 = vmatprep.subr.mxu0 0.0
    %732 = vmatpush1.msra.mxu0 0.0
    %733 = vmatprep.subr.mxu0 0.0
    %734 = vmatpush1.msra.mxu0 0.0
    %735 = vmatprep.mubr.f32.mxu0 0.0
    %736 = vmatmul.mubr.f32.gmra.mrb[0].mxu0 %v648
    %v737 = vpop.f32.mrb[0].mxu0
    %v738 = vadd.f32 %v645, %v737
    %v739 = vpop.f32.mrb[0].mxu0
    %740 = vmatprep.mubr.f32.mxu0 0.0
    %741 = vmatmul.mubr.f32.gmra.mrb[0].mxu0 %v651
    %v742 = vpop.f32.mrb[0].mxu0
    %v743 = vadd.f32 %v645, %v742
    %v744 = vpop.f32.mrb[0].mxu0
    %745 = vmatprep.mubr.f32.mxu0 0.0
    %746 = vmatmul.mubr.f32.gmra.mrb[0].mxu0 %v654
    %v747 = vpop.f32.mrb[0].mxu0
    %v748 = vadd.f32 %v645, %v747
    %v749 = vpop.f32.mrb[0].mxu0
    %750 = vmatprep.mubr.f32.mxu0 0.0
    %751 = vmatmul.mubr.f32.gmra.mrb[0].mxu0 %v657
    %v752 = vpop.f32.mrb[0].mxu0
    %v753 = vadd.f32 %v645, %v752
    %v754 = vpop.f32.mrb[0].mxu0
    %755 = vmatprep.mubr.f32.mxu0 0.0
    %756 = vmatmul.mubr.f32.gmra.mrb[0].mxu0 %v660
    %v757 = vpop.f32.mrb[0].mxu0
    %v758 = vadd.f32 %v645, %v757
    %v759 = vpop.f32.mrb[0].mxu0
    %760 = vmatprep.mubr.f32.mxu0 0.0
    %761 = vmatmul.mubr.f32.gmra.mrb[0].mxu0 %v663
    %v762 = vpop.f32.mrb[0].mxu0
    %v763 = vadd.f32 %v645, %v762
    %v764 = vpop.f32.mrb[0].mxu0
    %765 = vmatprep.mubr.f32.mxu0 0.0
    %766 = vmatmul.mubr.f32.gmra.mrb[0].mxu0 %v666
    %v767 = vpop.f32.mrb[0].mxu0
    %v768 = vadd.f32 %v645, %v767
    %v769 = vpop.f32.mrb[0].mxu0
    %770 = vmatprep.mubr.f32.mxu0 0.0
    %771 = vmatmul.mubr.f32.gmra.mrb[0].mxu0 %v669
    %v772 = vpop.f32.mrb[0].mxu0
    %v773 = vadd.f32 %v645, %v772
    %v774 = vpop.f32.mrb[0].mxu0
    %775 = vdwg.mxu0
    %776 = vst [vmem:[#allocation2] sm:$0xff] %v738
    %777 = vst [vmem:[#allocation2 + $0x8] sm:$0xff] %v743
    %778 = vst [vmem:[#allocation2 + $0x10] sm:$0xff] %v748
    %779 = vst [vmem:[#allocation2 + $0x18] sm:$0xff] %v753
    %780 = vst [vmem:[#allocation2 + $0x20] sm:$0xff] %v758
    %781 = vst [vmem:[#allocation2 + $0x28] sm:$0xff] %v763
    %782 = vst [vmem:[#allocation2 + $0x30] sm:$0xff] %v768
    %783 = vst [vmem:[#allocation2 + $0x38] sm:$0xff] %v773
    %v784 = vld [vmem:[%s9] sm:$0xff]
    %v785 = vld [vmem:[%s9 + $0x8] sm:$0xff]
    %v786 = vld [vmem:[%s9 + $0x10] sm:$0xff]
    %v787 = vld [vmem:[%s9 + $0x18] sm:$0xff]
    %v788 = vld [vmem:[#allocation2] sm:$0xff]
    %v790 = vsel %vm66, 0.0, 0
    %792 = vmatprep.subr.mxu0 0.0
    %793 = vmatpush1.msra.mxu0 %v784
    %794 = vmatprep.subr.mxu0 0.0
    %795 = vmatpush1.msra.mxu0 %v785
    %796 = vmatprep.subr.mxu0 0.0
    %797 = vmatpush1.msra.mxu0 %v786
    %798 = vmatprep.subr.mxu0 0.0
    %799 = vmatpush1.msra.mxu0 %v787
    %800 = vmatprep.subr.mxu0 0.0
    %801 = vmatpush1.msra.mxu0 0.0
    %802 = vmatprep.subr.mxu0 0.0
    %803 = vmatpush1.msra.mxu0 0.0
    %804 = vmatprep.subr.mxu0 0.0
    %805 = vmatpush1.msra.mxu0 0.0
    %806 = vmatprep.subr.mxu0 0.0
    %807 = vmatpush1.msra.mxu0 0.0
    %808 = vmatprep.subr.mxu0 0.0
    %809 = vmatpush1.msra.mxu0 0.0
    %810 = vmatprep.subr.mxu0 0.0
    %811 = vmatpush1.msra.mxu0 0.0
    %812 = vmatprep.subr.mxu0 0.0
    %813 = vmatpush1.msra.mxu0 0.0
    %814 = vmatprep.subr.mxu0 0.0
    %815 = vmatpush1.msra.mxu0 0.0
    %816 = vmatprep.subr.mxu0 0.0
    %817 = vmatpush1.msra.mxu0 0.0
    %818 = vmatprep.subr.mxu0 0.0
    %819 = vmatpush1.msra.mxu0 0.0
    %820 = vmatprep.subr.mxu0 0.0
    %821 = vmatpush1.msra.mxu0 0.0
    %822 = vmatprep.subr.mxu0 0.0
    %823 = vmatpush1.msra.mxu0 0.0
    %824 = vmatprep.subr.mxu0 0.0
    %825 = vmatpush1.msra.mxu0 0.0
    %826 = vmatprep.subr.mxu0 0.0
    %827 = vmatpush1.msra.mxu0 0.0
    %828 = vmatprep.subr.mxu0 0.0
    %829 = vmatpush1.msra.mxu0 0.0
    %830 = vmatprep.subr.mxu0 0.0
    %831 = vmatpush1.msra.mxu0 0.0
    %832 = vmatprep.subr.mxu0 0.0
    %833 = vmatpush1.msra.mxu0 0.0
    %834 = vmatprep.subr.mxu0 0.0
    %835 = vmatpush1.msra.mxu0 0.0
    %836 = vmatprep.subr.mxu0 0.0
    %837 = vmatpush1.msra.mxu0 0.0
    %838 = vmatprep.subr.mxu0 0.0
    %839 = vmatpush1.msra.mxu0 0.0
    %840 = vmatprep.subr.mxu0 0.0
    %841 = vmatpush1.msra.mxu0 0.0
    %842 = vmatprep.subr.mxu0 0.0
    %843 = vmatpush1.msra.mxu0 0.0
    %844 = vmatprep.subr.mxu0 0.0
    %845 = vmatpush1.msra.mxu0 0.0
    %846 = vmatprep.subr.mxu0 0.0
    %847 = vmatpush1.msra.mxu0 0.0
    %848 = vmatprep.subr.mxu0 0.0
    %849 = vmatpush1.msra.mxu0 0.0
    %850 = vmatprep.subr.mxu0 0.0
    %851 = vmatpush1.msra.mxu0 0.0
    %852 = vmatprep.subr.mxu0 0.0
    %853 = vmatpush1.msra.mxu0 0.0
    %854 = vmatprep.subr.mxu0 0.0
    %855 = vmatpush1.msra.mxu0 0.0
    %856 = vmatprep.mubr.f32.mxu0 0.0
    %857 = vmatmul.mubr.f32.gmra.mrb[0].mxu0 %v790
    %v858 = vpop.f32.mrb[0].mxu0
    %v859 = vadd.f32 0.0, %v858
    %v860 = vpop.f32.mrb[0].mxu0
    %861 = vdwg.mxu0
    %v862 = vadd.f32 %v788, %v859
    %v863 = vxor.u32 %v862, 2147483648
    %v864 = vmul.f32 %v863, 1.442695
    %v865 = vpow.pop %v864
    %v866 = vadd.f32 %v865, 1.0
    %v867 = vrcp.pop %v866
    %v868 = vmul.f32 1.0, %v867
    %v869 = vtanh.pop %v862
    %v870 = vmul.f32 %v868, 0.0
    %872 = vrot.lane.b32.xlu0 %v869, 64
    %v873 = vpop.permute.xlu0 %872
    %v875 = vmul.f32 %v868, %v873
    %877 = vrot.lane.b32.xlu0 %v875, 32
    %v878 = vpop.permute.xlu0 %877
    %v880 = vadd.f32 %v870, %v878
    %v881 = vtanh.pop %v880
    %883 = vrot.lane.b32.xlu0 %v881, 64
    %v884 = vpop.permute.xlu0 %883
    %v886 = vmul.f32 %v868, %v884
    %888 = vrot.lane.b32.xlu0 %v886, 32
    %v889 = vpop.permute.xlu0 %888
    %891 = vst.msk [vmem:[#allocation3] sm:$0xff] %vm66, %v889
    %s892 = scalar_lea.vmem [#allocation2], 8
    %v893 = vld [vmem:[%s892] sm:$0xff]
    %v894 = vsel %vm66, %v889, 0
    %896 = vmatprep.subr.mxu0 0.0
    %897 = vmatpush1.msra.mxu0 %v784
    %898 = vmatprep.subr.mxu0 0.0
    %899 = vmatpush1.msra.mxu0 %v785
    %900 = vmatprep.subr.mxu0 0.0
    %901 = vmatpush1.msra.mxu0 %v786
    %902 = vmatprep.subr.mxu0 0.0
    %903 = vmatpush1.msra.mxu0 %v787
    %904 = vmatprep.subr.mxu0 0.0
    %905 = vmatpush1.msra.mxu0 0.0
    %906 = vmatprep.subr.mxu0 0.0
    %907 = vmatpush1.msra.mxu0 0.0
    %908 = vmatprep.subr.mxu0 0.0
    %909 = vmatpush1.msra.mxu0 0.0
    %910 = vmatprep.subr.mxu0 0.0
    %911 = vmatpush1.msra.mxu0 0.0
    %912 = vmatprep.subr.mxu0 0.0
    %913 = vmatpush1.msra.mxu0 0.0
    %914 = vmatprep.subr.mxu0 0.0
    %915 = vmatpush1.msra.mxu0 0.0
    %916 = vmatprep.subr.mxu0 0.0
    %917 = vmatpush1.msra.mxu0 0.0
    %918 = vmatprep.subr.mxu0 0.0
    %919 = vmatpush1.msra.mxu0 0.0
    %920 = vmatprep.subr.mxu0 0.0
    %921 = vmatpush1.msra.mxu0 0.0
    %922 = vmatprep.subr.mxu0 0.0
    %923 = vmatpush1.msra.mxu0 0.0
    %924 = vmatprep.subr.mxu0 0.0
    %925 = vmatpush1.msra.mxu0 0.0
    %926 = vmatprep.subr.mxu0 0.0
    %927 = vmatpush1.msra.mxu0 0.0
    %928 = vmatprep.subr.mxu0 0.0
    %929 = vmatpush1.msra.mxu0 0.0
    %930 = vmatprep.subr.mxu0 0.0
    %931 = vmatpush1.msra.mxu0 0.0
    %932 = vmatprep.subr.mxu0 0.0
    %933 = vmatpush1.msra.mxu0 0.0
    %934 = vmatprep.subr.mxu0 0.0
    %935 = vmatpush1.msra.mxu0 0.0
    %936 = vmatprep.subr.mxu0 0.0
    %937 = vmatpush1.msra.mxu0 0.0
    %938 = vmatprep.subr.mxu0 0.0
    %939 = vmatpush1.msra.mxu0 0.0
    %940 = vmatprep.subr.mxu0 0.0
    %941 = vmatpush1.msra.mxu0 0.0
    %942 = vmatprep.subr.mxu0 0.0
    %943 = vmatpush1.msra.mxu0 0.0
    %944 = vmatprep.subr.mxu0 0.0
    %945 = vmatpush1.msra.mxu0 0.0
    %946 = vmatprep.subr.mxu0 0.0
    %947 = vmatpush1.msra.mxu0 0.0
    %948 = vmatprep.subr.mxu0 0.0
    %949 = vmatpush1.msra.mxu0 0.0
    %950 = vmatprep.subr.mxu0 0.0
    %951 = vmatpush1.msra.mxu0 0.0
    %952 = vmatprep.subr.mxu0 0.0
    %953 = vmatpush1.msra.mxu0 0.0
    %954 = vmatprep.subr.mxu0 0.0
    %955 = vmatpush1.msra.mxu0 0.0
    %956 = vmatprep.subr.mxu0 0.0
    %957 = vmatpush1.msra.mxu0 0.0
    %958 = vmatprep.subr.mxu0 0.0
    %959 = vmatpush1.msra.mxu0 0.0
    %960 = vmatprep.mubr.f32.mxu0 0.0
    %961 = vmatmul.mubr.f32.gmra.mrb[0].mxu0 %v894
    %v962 = vpop.f32.mrb[0].mxu0
    %v963 = vadd.f32 0.0, %v962
    %v964 = vpop.f32.mrb[0].mxu0
    %965 = vdwg.mxu0
    %v966 = vadd.f32 %v893, %v963
    %v967 = vxor.u32 %v966, 2147483648
    %v968 = vmul.f32 %v967, 1.442695
    %v969 = vpow.pop %v968
    %v970 = vadd.f32 %v969, 1.0
    %v971 = vrcp.pop %v970
    %v972 = vmul.f32 1.0, %v971
    %v973 = vtanh.pop %v966
    %v974 = vmul.f32 %v972, %v880
    %976 = vrot.lane.b32.xlu0 %v973, 64
    %v977 = vpop.permute.xlu0 %976
    %v979 = vmul.f32 %v972, %v977
    %981 = vrot.lane.b32.xlu0 %v979, 32
    %v982 = vpop.permute.xlu0 %981
    %v984 = vadd.f32 %v974, %v982
    %v985 = vtanh.pop %v984
    %987 = vrot.lane.b32.xlu0 %v985, 64
    %v988 = vpop.permute.xlu0 %987
    %v990 = vmul.f32 %v972, %v988
    %992 = vrot.lane.b32.xlu0 %v990, 32
    %v993 = vpop.permute.xlu0 %992
    %s995 = scalar_lea.vmem [#allocation3], 8
    %996 = vst.msk [vmem:[%s995] sm:$0xff] %vm66, %v993
    %s997 = scalar_lea.vmem [#allocation2], 16
    %v998 = vld [vmem:[%s997] sm:$0xff]
    %v999 = vsel %vm66, %v993, 0
    %1001 = vmatprep.subr.mxu0 0.0
    %1002 = vmatpush1.msra.mxu0 %v784
    %1003 = vmatprep.subr.mxu0 0.0
    %1004 = vmatpush1.msra.mxu0 %v785
    %1005 = vmatprep.subr.mxu0 0.0
    %1006 = vmatpush1.msra.mxu0 %v786
    %1007 = vmatprep.subr.mxu0 0.0
    %1008 = vmatpush1.msra.mxu0 %v787
    %1009 = vmatprep.subr.mxu0 0.0
    %1010 = vmatpush1.msra.mxu0 0.0
    %1011 = vmatprep.subr.mxu0 0.0
    %1012 = vmatpush1.msra.mxu0 0.0
    %1013 = vmatprep.subr.mxu0 0.0
    %1014 = vmatpush1.msra.mxu0 0.0
    %1015 = vmatprep.subr.mxu0 0.0
    %1016 = vmatpush1.msra.mxu0 0.0
    %1017 = vmatprep.subr.mxu0 0.0
    %1018 = vmatpush1.msra.mxu0 0.0
    %1019 = vmatprep.subr.mxu0 0.0
    %1020 = vmatpush1.msra.mxu0 0.0
    %1021 = vmatprep.subr.mxu0 0.0
    %1022 = vmatpush1.msra.mxu0 0.0
    %1023 = vmatprep.subr.mxu0 0.0
    %1024 = vmatpush1.msra.mxu0 0.0
    %1025 = vmatprep.subr.mxu0 0.0
    %1026 = vmatpush1.msra.mxu0 0.0
    %1027 = vmatprep.subr.mxu0 0.0
    %1028 = vmatpush1.msra.mxu0 0.0
    %1029 = vmatprep.subr.mxu0 0.0
    %1030 = vmatpush1.msra.mxu0 0.0
    %1031 = vmatprep.subr.mxu0 0.0
    %1032 = vmatpush1.msra.mxu0 0.0
    %1033 = vmatprep.subr.mxu0 0.0
    %1034 = vmatpush1.msra.mxu0 0.0
    %1035 = vmatprep.subr.mxu0 0.0
    %1036 = vmatpush1.msra.mxu0 0.0
    %1037 = vmatprep.subr.mxu0 0.0
    %1038 = vmatpush1.msra.mxu0 0.0
    %1039 = vmatprep.subr.mxu0 0.0
    %1040 = vmatpush1.msra.mxu0 0.0
    %1041 = vmatprep.subr.mxu0 0.0
    %1042 = vmatpush1.msra.mxu0 0.0
    %1043 = vmatprep.subr.mxu0 0.0
    %1044 = vmatpush1.msra.mxu0 0.0
    %1045 = vmatprep.subr.mxu0 0.0
    %1046 = vmatpush1.msra.mxu0 0.0
    %1047 = vmatprep.subr.mxu0 0.0
    %1048 = vmatpush1.msra.mxu0 0.0
    %1049 = vmatprep.subr.mxu0 0.0
    %1050 = vmatpush1.msra.mxu0 0.0
    %1051 = vmatprep.subr.mxu0 0.0
    %1052 = vmatpush1.msra.mxu0 0.0
    %1053 = vmatprep.subr.mxu0 0.0
    %1054 = vmatpush1.msra.mxu0 0.0
    %1055 = vmatprep.subr.mxu0 0.0
    %1056 = vmatpush1.msra.mxu0 0.0
    %1057 = vmatprep.subr.mxu0 0.0
    %1058 = vmatpush1.msra.mxu0 0.0
    %1059 = vmatprep.subr.mxu0 0.0
    %1060 = vmatpush1.msra.mxu0 0.0
    %1061 = vmatprep.subr.mxu0 0.0
    %1062 = vmatpush1.msra.mxu0 0.0
    %1063 = vmatprep.subr.mxu0 0.0
    %1064 = vmatpush1.msra.mxu0 0.0
    %1065 = vmatprep.mubr.f32.mxu0 0.0
    %1066 = vmatmul.mubr.f32.gmra.mrb[0].mxu0 %v999
    %v1067 = vpop.f32.mrb[0].mxu0
    %v1068 = vadd.f32 0.0, %v1067
    %v1069 = vpop.f32.mrb[0].mxu0
    %1070 = vdwg.mxu0
    %v1071 = vadd.f32 %v998, %v1068
    %v1072 = vxor.u32 %v1071, 2147483648
    %v1073 = vmul.f32 %v1072, 1.442695
    %v1074 = vpow.pop %v1073
    %v1075 = vadd.f32 %v1074, 1.0
    %v1076 = vrcp.pop %v1075
    %v1077 = vmul.f32 1.0, %v1076
    %v1078 = vtanh.pop %v1071
    %v1079 = vmul.f32 %v1077, %v984
    %1081 = vrot.lane.b32.xlu0 %v1078, 64
    %v1082 = vpop.permute.xlu0 %1081
    %v1084 = vmul.f32 %v1077, %v1082
    %1086 = vrot.lane.b32.xlu0 %v1084, 32
    %v1087 = vpop.permute.xlu0 %1086
    %v1089 = vadd.f32 %v1079, %v1087
    %v1090 = vtanh.pop %v1089
    %1092 = vrot.lane.b32.xlu0 %v1090, 64
    %v1093 = vpop.permute.xlu0 %1092
    %v1095 = vmul.f32 %v1077, %v1093
    %1097 = vrot.lane.b32.xlu0 %v1095, 32
    %v1098 = vpop.permute.xlu0 %1097
    %s1100 = scalar_lea.vmem [#allocation3], 16
    %1101 = vst.msk [vmem:[%s1100] sm:$0xff] %vm66, %v1098
    %s1102 = scalar_lea.vmem [#allocation2], 24
    %v1103 = vld [vmem:[%s1102] sm:$0xff]
    %v1104 = vsel %vm66, %v1098, 0
    %1106 = vmatprep.subr.mxu0 0.0
    %1107 = vmatpush1.msra.mxu0 %v784
    %1108 = vmatprep.subr.mxu0 0.0
    %1109 = vmatpush1.msra.mxu0 %v785
    %1110 = vmatprep.subr.mxu0 0.0
    %1111 = vmatpush1.msra.mxu0 %v786
    %1112 = vmatprep.subr.mxu0 0.0
    %1113 = vmatpush1.msra.mxu0 %v787
    %1114 = vmatprep.subr.mxu0 0.0
    %1115 = vmatpush1.msra.mxu0 0.0
    %1116 = vmatprep.subr.mxu0 0.0
    %1117 = vmatpush1.msra.mxu0 0.0
    %1118 = vmatprep.subr.mxu0 0.0
    %1119 = vmatpush1.msra.mxu0 0.0
    %1120 = vmatprep.subr.mxu0 0.0
    %1121 = vmatpush1.msra.mxu0 0.0
    %1122 = vmatprep.subr.mxu0 0.0
    %1123 = vmatpush1.msra.mxu0 0.0
    %1124 = vmatprep.subr.mxu0 0.0
    %1125 = vmatpush1.msra.mxu0 0.0
    %1126 = vmatprep.subr.mxu0 0.0
    %1127 = vmatpush1.msra.mxu0 0.0
    %1128 = vmatprep.subr.mxu0 0.0
    %1129 = vmatpush1.msra.mxu0 0.0
    %1130 = vmatprep.subr.mxu0 0.0
    %1131 = vmatpush1.msra.mxu0 0.0
    %1132 = vmatprep.subr.mxu0 0.0
    %1133 = vmatpush1.msra.mxu0 0.0
    %1134 = vmatprep.subr.mxu0 0.0
    %1135 = vmatpush1.msra.mxu0 0.0
    %1136 = vmatprep.subr.mxu0 0.0
    %1137 = vmatpush1.msra.mxu0 0.0
    %1138 = vmatprep.subr.mxu0 0.0
    %1139 = vmatpush1.msra.mxu0 0.0
    %1140 = vmatprep.subr.mxu0 0.0
    %1141 = vmatpush1.msra.mxu0 0.0
    %1142 = vmatprep.subr.mxu0 0.0
    %1143 = vmatpush1.msra.mxu0 0.0
    %1144 = vmatprep.subr.mxu0 0.0
    %1145 = vmatpush1.msra.mxu0 0.0
    %1146 = vmatprep.subr.mxu0 0.0
    %1147 = vmatpush1.msra.mxu0 0.0
    %1148 = vmatprep.subr.mxu0 0.0
    %1149 = vmatpush1.msra.mxu0 0.0
    %1150 = vmatprep.subr.mxu0 0.0
    %1151 = vmatpush1.msra.mxu0 0.0
    %1152 = vmatprep.subr.mxu0 0.0
    %1153 = vmatpush1.msra.mxu0 0.0
    %1154 = vmatprep.subr.mxu0 0.0
    %1155 = vmatpush1.msra.mxu0 0.0
    %1156 = vmatprep.subr.mxu0 0.0
    %1157 = vmatpush1.msra.mxu0 0.0
    %1158 = vmatprep.subr.mxu0 0.0
    %1159 = vmatpush1.msra.mxu0 0.0
    %1160 = vmatprep.subr.mxu0 0.0
    %1161 = vmatpush1.msra.mxu0 0.0
    %1162 = vmatprep.subr.mxu0 0.0
    %1163 = vmatpush1.msra.mxu0 0.0
    %1164 = vmatprep.subr.mxu0 0.0
    %1165 = vmatpush1.msra.mxu0 0.0
    %1166 = vmatprep.subr.mxu0 0.0
    %1167 = vmatpush1.msra.mxu0 0.0
    %1168 = vmatprep.subr.mxu0 0.0
    %1169 = vmatpush1.msra.mxu0 0.0
    %1170 = vmatprep.mubr.f32.mxu0 0.0
    %1171 = vmatmul.mubr.f32.gmra.mrb[0].mxu0 %v1104
    %v1172 = vpop.f32.mrb[0].mxu0
    %v1173 = vadd.f32 0.0, %v1172
    %v1174 = vpop.f32.mrb[0].mxu0
    %1175 = vdwg.mxu0
    %v1176 = vadd.f32 %v1103, %v1173
    %v1177 = vxor.u32 %v1176, 2147483648
    %v1178 = vmul.f32 %v1177, 1.442695
    %v1179 = vpow.pop %v1178
    %v1180 = vadd.f32 %v1179, 1.0
    %v1181 = vrcp.pop %v1180
    %v1182 = vmul.f32 1.0, %v1181
    %v1183 = vtanh.pop %v1176
    %v1184 = vmul.f32 %v1182, %v1089
    %1186 = vrot.lane.b32.xlu0 %v1183, 64
    %v1187 = vpop.permute.xlu0 %1186
    %v1189 = vmul.f32 %v1182, %v1187
    %1191 = vrot.lane.b32.xlu0 %v1189, 32
    %v1192 = vpop.permute.xlu0 %1191
    %v1194 = vadd.f32 %v1184, %v1192
    %v1195 = vtanh.pop %v1194
    %1197 = vrot.lane.b32.xlu0 %v1195, 64
    %v1198 = vpop.permute.xlu0 %1197
    %v1200 = vmul.f32 %v1182, %v1198
    %1202 = vrot.lane.b32.xlu0 %v1200, 32
    %v1203 = vpop.permute.xlu0 %1202
    %s1205 = scalar_lea.vmem [#allocation3], 24
    %1206 = vst.msk [vmem:[%s1205] sm:$0xff] %vm66, %v1203
    %s1207 = scalar_lea.vmem [#allocation2], 32
    %v1208 = vld [vmem:[%s1207] sm:$0xff]
    %v1209 = vsel %vm66, %v1203, 0
    %1211 = vmatprep.subr.mxu0 0.0
    %1212 = vmatpush1.msra.mxu0 %v784
    %1213 = vmatprep.subr.mxu0 0.0
    %1214 = vmatpush1.msra.mxu0 %v785
    %1215 = vmatprep.subr.mxu0 0.0
    %1216 = vmatpush1.msra.mxu0 %v786
    %1217 = vmatprep.subr.mxu0 0.0
    %1218 = vmatpush1.msra.mxu0 %v787
    %1219 = vmatprep.subr.mxu0 0.0
    %1220 = vmatpush1.msra.mxu0 0.0
    %1221 = vmatprep.subr.mxu0 0.0
    %1222 = vmatpush1.msra.mxu0 0.0
    %1223 = vmatprep.subr.mxu0 0.0
    %1224 = vmatpush1.msra.mxu0 0.0
    %1225 = vmatprep.subr.mxu0 0.0
    %1226 = vmatpush1.msra.mxu0 0.0
    %1227 = vmatprep.subr.mxu0 0.0
    %1228 = vmatpush1.msra.mxu0 0.0
    %1229 = vmatprep.subr.mxu0 0.0
    %1230 = vmatpush1.msra.mxu0 0.0
    %1231 = vmatprep.subr.mxu0 0.0
    %1232 = vmatpush1.msra.mxu0 0.0
    %1233 = vmatprep.subr.mxu0 0.0
    %1234 = vmatpush1.msra.mxu0 0.0
    %1235 = vmatprep.subr.mxu0 0.0
    %1236 = vmatpush1.msra.mxu0 0.0
    %1237 = vmatprep.subr.mxu0 0.0
    %1238 = vmatpush1.msra.mxu0 0.0
    %1239 = vmatprep.subr.mxu0 0.0
    %1240 = vmatpush1.msra.mxu0 0.0
    %1241 = vmatprep.subr.mxu0 0.0
    %1242 = vmatpush1.msra.mxu0 0.0
    %1243 = vmatprep.subr.mxu0 0.0
    %1244 = vmatpush1.msra.mxu0 0.0
    %1245 = vmatprep.subr.mxu0 0.0
    %1246 = vmatpush1.msra.mxu0 0.0
    %1247 = vmatprep.subr.mxu0 0.0
    %1248 = vmatpush1.msra.mxu0 0.0
    %1249 = vmatprep.subr.mxu0 0.0
    %1250 = vmatpush1.msra.mxu0 0.0
    %1251 = vmatprep.subr.mxu0 0.0
    %1252 = vmatpush1.msra.mxu0 0.0
    %1253 = vmatprep.subr.mxu0 0.0
    %1254 = vmatpush1.msra.mxu0 0.0
    %1255 = vmatprep.subr.mxu0 0.0
    %1256 = vmatpush1.msra.mxu0 0.0
    %1257 = vmatprep.subr.mxu0 0.0
    %1258 = vmatpush1.msra.mxu0 0.0
    %1259 = vmatprep.subr.mxu0 0.0
    %1260 = vmatpush1.msra.mxu0 0.0
    %1261 = vmatprep.subr.mxu0 0.0
    %1262 = vmatpush1.msra.mxu0 0.0
    %1263 = vmatprep.subr.mxu0 0.0
    %1264 = vmatpush1.msra.mxu0 0.0
    %1265 = vmatprep.subr.mxu0 0.0
    %1266 = vmatpush1.msra.mxu0 0.0
    %1267 = vmatprep.subr.mxu0 0.0
    %1268 = vmatpush1.msra.mxu0 0.0
    %1269 = vmatprep.subr.mxu0 0.0
    %1270 = vmatpush1.msra.mxu0 0.0
    %1271 = vmatprep.subr.mxu0 0.0
    %1272 = vmatpush1.msra.mxu0 0.0
    %1273 = vmatprep.subr.mxu0 0.0
    %1274 = vmatpush1.msra.mxu0 0.0
    %1275 = vmatprep.mubr.f32.mxu0 0.0
    %1276 = vmatmul.mubr.f32.gmra.mrb[0].mxu0 %v1209
    %v1277 = vpop.f32.mrb[0].mxu0
    %v1278 = vadd.f32 0.0, %v1277
    %v1279 = vpop.f32.mrb[0].mxu0
    %1280 = vdwg.mxu0
    %v1281 = vadd.f32 %v1208, %v1278
    %v1282 = vxor.u32 %v1281, 2147483648
    %v1283 = vmul.f32 %v1282, 1.442695
    %v1284 = vpow.pop %v1283
    %v1285 = vadd.f32 %v1284, 1.0
    %v1286 = vrcp.pop %v1285
    %v1287 = vmul.f32 1.0, %v1286
    %v1288 = vtanh.pop %v1281
    %v1289 = vmul.f32 %v1287, %v1194
    %1291 = vrot.lane.b32.xlu0 %v1288, 64
    %v1292 = vpop.permute.xlu0 %1291
    %v1294 = vmul.f32 %v1287, %v1292
    %1296 = vrot.lane.b32.xlu0 %v1294, 32
    %v1297 = vpop.permute.xlu0 %1296
    %v1299 = vadd.f32 %v1289, %v1297
    %v1300 = vtanh.pop %v1299
    %1302 = vrot.lane.b32.xlu0 %v1300, 64
    %v1303 = vpop.permute.xlu0 %1302
    %v1305 = vmul.f32 %v1287, %v1303
    %1307 = vrot.lane.b32.xlu0 %v1305, 32
    %v1308 = vpop.permute.xlu0 %1307
    %s1310 = scalar_lea.vmem [#allocation3], 32
    %1311 = vst.msk [vmem:[%s1310] sm:$0xff] %vm66, %v1308
    %s1312 = scalar_lea.vmem [#allocation2], 40
    %v1313 = vld [vmem:[%s1312] sm:$0xff]
    %v1314 = vsel %vm66, %v1308, 0
    %1316 = vmatprep.subr.mxu0 0.0
    %1317 = vmatpush1.msra.mxu0 %v784
    %1318 = vmatprep.subr.mxu0 0.0
    %1319 = vmatpush1.msra.mxu0 %v785
    %1320 = vmatprep.subr.mxu0 0.0
    %1321 = vmatpush1.msra.mxu0 %v786
    %1322 = vmatprep.subr.mxu0 0.0
    %1323 = vmatpush1.msra.mxu0 %v787
    %1324 = vmatprep.subr.mxu0 0.0
    %1325 = vmatpush1.msra.mxu0 0.0
    %1326 = vmatprep.subr.mxu0 0.0
    %1327 = vmatpush1.msra.mxu0 0.0
    %1328 = vmatprep.subr.mxu0 0.0
    %1329 = vmatpush1.msra.mxu0 0.0
    %1330 = vmatprep.subr.mxu0 0.0
    %1331 = vmatpush1.msra.mxu0 0.0
    %1332 = vmatprep.subr.mxu0 0.0
    %1333 = vmatpush1.msra.mxu0 0.0
    %1334 = vmatprep.subr.mxu0 0.0
    %1335 = vmatpush1.msra.mxu0 0.0
    %1336 = vmatprep.subr.mxu0 0.0
    %1337 = vmatpush1.msra.mxu0 0.0
    %1338 = vmatprep.subr.mxu0 0.0
    %1339 = vmatpush1.msra.mxu0 0.0
    %1340 = vmatprep.subr.mxu0 0.0
    %1341 = vmatpush1.msra.mxu0 0.0
    %1342 = vmatprep.subr.mxu0 0.0
    %1343 = vmatpush1.msra.mxu0 0.0
    %1344 = vmatprep.subr.mxu0 0.0
    %1345 = vmatpush1.msra.mxu0 0.0
    %1346 = vmatprep.subr.mxu0 0.0
    %1347 = vmatpush1.msra.mxu0 0.0
    %1348 = vmatprep.subr.mxu0 0.0
    %1349 = vmatpush1.msra.mxu0 0.0
    %1350 = vmatprep.subr.mxu0 0.0
    %1351 = vmatpush1.msra.mxu0 0.0
    %1352 = vmatprep.subr.mxu0 0.0
    %1353 = vmatpush1.msra.mxu0 0.0
    %1354 = vmatprep.subr.mxu0 0.0
    %1355 = vmatpush1.msra.mxu0 0.0
    %1356 = vmatprep.subr.mxu0 0.0
    %1357 = vmatpush1.msra.mxu0 0.0
    %1358 = vmatprep.subr.mxu0 0.0
    %1359 = vmatpush1.msra.mxu0 0.0
    %1360 = vmatprep.subr.mxu0 0.0
    %1361 = vmatpush1.msra.mxu0 0.0
    %1362 = vmatprep.subr.mxu0 0.0
    %1363 = vmatpush1.msra.mxu0 0.0
    %1364 = vmatprep.subr.mxu0 0.0
    %1365 = vmatpush1.msra.mxu0 0.0
    %1366 = vmatprep.subr.mxu0 0.0
    %1367 = vmatpush1.msra.mxu0 0.0
    %1368 = vmatprep.subr.mxu0 0.0
    %1369 = vmatpush1.msra.mxu0 0.0
    %1370 = vmatprep.subr.mxu0 0.0
    %1371 = vmatpush1.msra.mxu0 0.0
    %1372 = vmatprep.subr.mxu0 0.0
    %1373 = vmatpush1.msra.mxu0 0.0
    %1374 = vmatprep.subr.mxu0 0.0
    %1375 = vmatpush1.msra.mxu0 0.0
    %1376 = vmatprep.subr.mxu0 0.0
    %1377 = vmatpush1.msra.mxu0 0.0
    %1378 = vmatprep.subr.mxu0 0.0
    %1379 = vmatpush1.msra.mxu0 0.0
    %1380 = vmatprep.mubr.f32.mxu0 0.0
    %1381 = vmatmul.mubr.f32.gmra.mrb[0].mxu0 %v1314
    %v1382 = vpop.f32.mrb[0].mxu0
    %v1383 = vadd.f32 0.0, %v1382
    %v1384 = vpop.f32.mrb[0].mxu0
    %1385 = vdwg.mxu0
    %v1386 = vadd.f32 %v1313, %v1383
    %v1387 = vxor.u32 %v1386, 2147483648
    %v1388 = vmul.f32 %v1387, 1.442695
    %v1389 = vpow.pop %v1388
    %v1390 = vadd.f32 %v1389, 1.0
    %v1391 = vrcp.pop %v1390
    %v1392 = vmul.f32 1.0, %v1391
    %v1393 = vtanh.pop %v1386
    %v1394 = vmul.f32 %v1392, %v1299
    %1396 = vrot.lane.b32.xlu0 %v1393, 64
    %v1397 = vpop.permute.xlu0 %1396
    %v1399 = vmul.f32 %v1392, %v1397
    %1401 = vrot.lane.b32.xlu0 %v1399, 32
    %v1402 = vpop.permute.xlu0 %1401
    %v1404 = vadd.f32 %v1394, %v1402
    %v1405 = vtanh.pop %v1404
    %1407 = vrot.lane.b32.xlu0 %v1405, 64
    %v1408 = vpop.permute.xlu0 %1407
    %v1410 = vmul.f32 %v1392, %v1408
    %1412 = vrot.lane.b32.xlu0 %v1410, 32
    %v1413 = vpop.permute.xlu0 %1412
    %s1415 = scalar_lea.vmem [#allocation3], 40
    %1416 = vst.msk [vmem:[%s1415] sm:$0xff] %vm66, %v1413
    %s1417 = scalar_lea.vmem [#allocation2], 48
    %v1418 = vld [vmem:[%s1417] sm:$0xff]
    %v1419 = vsel %vm66, %v1413, 0
    %1421 = vmatprep.subr.mxu0 0.0
    %1422 = vmatpush1.msra.mxu0 %v784
    %1423 = vmatprep.subr.mxu0 0.0
    %1424 = vmatpush1.msra.mxu0 %v785
    %1425 = vmatprep.subr.mxu0 0.0
    %1426 = vmatpush1.msra.mxu0 %v786
    %1427 = vmatprep.subr.mxu0 0.0
    %1428 = vmatpush1.msra.mxu0 %v787
    %1429 = vmatprep.subr.mxu0 0.0
    %1430 = vmatpush1.msra.mxu0 0.0
    %1431 = vmatprep.subr.mxu0 0.0
    %1432 = vmatpush1.msra.mxu0 0.0
    %1433 = vmatprep.subr.mxu0 0.0
    %1434 = vmatpush1.msra.mxu0 0.0
    %1435 = vmatprep.subr.mxu0 0.0
    %1436 = vmatpush1.msra.mxu0 0.0
    %1437 = vmatprep.subr.mxu0 0.0
    %1438 = vmatpush1.msra.mxu0 0.0
    %1439 = vmatprep.subr.mxu0 0.0
    %1440 = vmatpush1.msra.mxu0 0.0
    %1441 = vmatprep.subr.mxu0 0.0
    %1442 = vmatpush1.msra.mxu0 0.0
    %1443 = vmatprep.subr.mxu0 0.0
    %1444 = vmatpush1.msra.mxu0 0.0
    %1445 = vmatprep.subr.mxu0 0.0
    %1446 = vmatpush1.msra.mxu0 0.0
    %1447 = vmatprep.subr.mxu0 0.0
    %1448 = vmatpush1.msra.mxu0 0.0
    %1449 = vmatprep.subr.mxu0 0.0
    %1450 = vmatpush1.msra.mxu0 0.0
    %1451 = vmatprep.subr.mxu0 0.0
    %1452 = vmatpush1.msra.mxu0 0.0
    %1453 = vmatprep.subr.mxu0 0.0
    %1454 = vmatpush1.msra.mxu0 0.0
    %1455 = vmatprep.subr.mxu0 0.0
    %1456 = vmatpush1.msra.mxu0 0.0
    %1457 = vmatprep.subr.mxu0 0.0
    %1458 = vmatpush1.msra.mxu0 0.0
    %1459 = vmatprep.subr.mxu0 0.0
    %1460 = vmatpush1.msra.mxu0 0.0
    %1461 = vmatprep.subr.mxu0 0.0
    %1462 = vmatpush1.msra.mxu0 0.0
    %1463 = vmatprep.subr.mxu0 0.0
    %1464 = vmatpush1.msra.mxu0 0.0
    %1465 = vmatprep.subr.mxu0 0.0
    %1466 = vmatpush1.msra.mxu0 0.0
    %1467 = vmatprep.subr.mxu0 0.0
    %1468 = vmatpush1.msra.mxu0 0.0
    %1469 = vmatprep.subr.mxu0 0.0
    %1470 = vmatpush1.msra.mxu0 0.0
    %1471 = vmatprep.subr.mxu0 0.0
    %1472 = vmatpush1.msra.mxu0 0.0
    %1473 = vmatprep.subr.mxu0 0.0
    %1474 = vmatpush1.msra.mxu0 0.0
    %1475 = vmatprep.subr.mxu0 0.0
    %1476 = vmatpush1.msra.mxu0 0.0
    %1477 = vmatprep.subr.mxu0 0.0
    %1478 = vmatpush1.msra.mxu0 0.0
    %1479 = vmatprep.subr.mxu0 0.0
    %1480 = vmatpush1.msra.mxu0 0.0
    %1481 = vmatprep.subr.mxu0 0.0
    %1482 = vmatpush1.msra.mxu0 0.0
    %1483 = vmatprep.subr.mxu0 0.0
    %1484 = vmatpush1.msra.mxu0 0.0
    %1485 = vmatprep.mubr.f32.mxu0 0.0
    %1486 = vmatmul.mubr.f32.gmra.mrb[0].mxu0 %v1419
    %v1487 = vpop.f32.mrb[0].mxu0
    %v1488 = vadd.f32 0.0, %v1487
    %v1489 = vpop.f32.mrb[0].mxu0
    %1490 = vdwg.mxu0
    %v1491 = vadd.f32 %v1418, %v1488
    %v1492 = vxor.u32 %v1491, 2147483648
    %v1493 = vmul.f32 %v1492, 1.442695
    %v1494 = vpow.pop %v1493
    %v1495 = vadd.f32 %v1494, 1.0
    %v1496 = vrcp.pop %v1495
    %v1497 = vmul.f32 1.0, %v1496
    %v1498 = vtanh.pop %v1491
    %v1499 = vmul.f32 %v1497, %v1404
    %1501 = vrot.lane.b32.xlu0 %v1498, 64
    %v1502 = vpop.permute.xlu0 %1501
    %v1504 = vmul.f32 %v1497, %v1502
    %1506 = vrot.lane.b32.xlu0 %v1504, 32
    %v1507 = vpop.permute.xlu0 %1506
    %v1509 = vadd.f32 %v1499, %v1507
    %v1510 = vtanh.pop %v1509
    %1512 = vrot.lane.b32.xlu0 %v1510, 64
    %v1513 = vpop.permute.xlu0 %1512
    %v1515 = vmul.f32 %v1497, %v1513
    %1517 = vrot.lane.b32.xlu0 %v1515, 32
    %v1518 = vpop.permute.xlu0 %1517
    %s1520 = scalar_lea.vmem [#allocation3], 48
    %1521 = vst.msk [vmem:[%s1520] sm:$0xff] %vm66, %v1518
    %s1522 = scalar_lea.vmem [#allocation2], 56
    %v1523 = vld [vmem:[%s1522] sm:$0xff]
    %v1524 = vsel %vm66, %v1518, 0
    %1526 = vmatprep.subr.mxu0 0.0
    %1527 = vmatpush1.msra.mxu0 %v784
    %1528 = vmatprep.subr.mxu0 0.0
    %1529 = vmatpush1.msra.mxu0 %v785
    %1530 = vmatprep.subr.mxu0 0.0
    %1531 = vmatpush1.msra.mxu0 %v786
    %1532 = vmatprep.subr.mxu0 0.0
    %1533 = vmatpush1.msra.mxu0 %v787
    %1534 = vmatprep.subr.mxu0 0.0
    %1535 = vmatpush1.msra.mxu0 0.0
    %1536 = vmatprep.subr.mxu0 0.0
    %1537 = vmatpush1.msra.mxu0 0.0
    %1538 = vmatprep.subr.mxu0 0.0
    %1539 = vmatpush1.msra.mxu0 0.0
    %1540 = vmatprep.subr.mxu0 0.0
    %1541 = vmatpush1.msra.mxu0 0.0
    %1542 = vmatprep.subr.mxu0 0.0
    %1543 = vmatpush1.msra.mxu0 0.0
    %1544 = vmatprep.subr.mxu0 0.0
    %1545 = vmatpush1.msra.mxu0 0.0
    %1546 = vmatprep.subr.mxu0 0.0
    %1547 = vmatpush1.msra.mxu0 0.0
    %1548 = vmatprep.subr.mxu0 0.0
    %1549 = vmatpush1.msra.mxu0 0.0
    %1550 = vmatprep.subr.mxu0 0.0
    %1551 = vmatpush1.msra.mxu0 0.0
    %1552 = vmatprep.subr.mxu0 0.0
    %1553 = vmatpush1.msra.mxu0 0.0
    %1554 = vmatprep.subr.mxu0 0.0
    %1555 = vmatpush1.msra.mxu0 0.0
    %1556 = vmatprep.subr.mxu0 0.0
    %1557 = vmatpush1.msra.mxu0 0.0
    %1558 = vmatprep.subr.mxu0 0.0
    %1559 = vmatpush1.msra.mxu0 0.0
    %1560 = vmatprep.subr.mxu0 0.0
    %1561 = vmatpush1.msra.mxu0 0.0
    %1562 = vmatprep.subr.mxu0 0.0
    %1563 = vmatpush1.msra.mxu0 0.0
    %1564 = vmatprep.subr.mxu0 0.0
    %1565 = vmatpush1.msra.mxu0 0.0
    %1566 = vmatprep.subr.mxu0 0.0
    %1567 = vmatpush1.msra.mxu0 0.0
    %1568 = vmatprep.subr.mxu0 0.0
    %1569 = vmatpush1.msra.mxu0 0.0
    %1570 = vmatprep.subr.mxu0 0.0
    %1571 = vmatpush1.msra.mxu0 0.0
    %1572 = vmatprep.subr.mxu0 0.0
    %1573 = vmatpush1.msra.mxu0 0.0
    %1574 = vmatprep.subr.mxu0 0.0
    %1575 = vmatpush1.msra.mxu0 0.0
    %1576 = vmatprep.subr.mxu0 0.0
    %1577 = vmatpush1.msra.mxu0 0.0
    %1578 = vmatprep.subr.mxu0 0.0
    %1579 = vmatpush1.msra.mxu0 0.0
    %1580 = vmatprep.subr.mxu0 0.0
    %1581 = vmatpush1.msra.mxu0 0.0
    %1582 = vmatprep.subr.mxu0 0.0
    %1583 = vmatpush1.msra.mxu0 0.0
    %1584 = vmatprep.subr.mxu0 0.0
    %1585 = vmatpush1.msra.mxu0 0.0
    %1586 = vmatprep.subr.mxu0 0.0
    %1587 = vmatpush1.msra.mxu0 0.0
    %1588 = vmatprep.subr.mxu0 0.0
    %1589 = vmatpush1.msra.mxu0 0.0
    %1590 = vmatprep.mubr.f32.mxu0 0.0
    %1591 = vmatmul.mubr.f32.gmra.mrb[0].mxu0 %v1524
    %v1592 = vpop.f32.mrb[0].mxu0
    %v1593 = vadd.f32 0.0, %v1592
    %v1594 = vpop.f32.mrb[0].mxu0
    %1595 = vdwg.mxu0
    %v1596 = vadd.f32 %v1523, %v1593
    %v1597 = vxor.u32 %v1596, 2147483648
    %v1598 = vmul.f32 %v1597, 1.442695
    %v1599 = vpow.pop %v1598
    %v1600 = vadd.f32 %v1599, 1.0
    %v1601 = vrcp.pop %v1600
    %v1602 = vmul.f32 1.0, %v1601
    %v1603 = vtanh.pop %v1596
    %v1604 = vmul.f32 %v1602, %v1509
    %1606 = vrot.lane.b32.xlu0 %v1603, 64
    %v1607 = vpop.permute.xlu0 %1606
    %v1609 = vmul.f32 %v1602, %v1607
    %1611 = vrot.lane.b32.xlu0 %v1609, 32
    %v1612 = vpop.permute.xlu0 %1611
    %v1614 = vadd.f32 %v1604, %v1612
    %v1615 = vtanh.pop %v1614
    %1617 = vrot.lane.b32.xlu0 %v1615, 64
    %v1618 = vpop.permute.xlu0 %1617
    %v1620 = vmul.f32 %v1602, %v1618
    %1622 = vrot.lane.b32.xlu0 %v1620, 32
    %v1623 = vpop.permute.xlu0 %1622
    %s1625 = scalar_lea.vmem [#allocation3], 56
    %1626 = vst.msk [vmem:[%s1625] sm:$0xff] %vm66, %v1623
    %v1627 = vld [vmem:[#allocation3] sm:$0xff]
    %v1628 = vld [vmem:[#allocation3 + $0x8] sm:$0xff]
    %v1629 = vld [vmem:[#allocation3 + $0x10] sm:$0xff]
    %v1630 = vld [vmem:[#allocation3 + $0x18] sm:$0xff]
    %v1631 = vld [vmem:[#allocation3 + $0x20] sm:$0xff]
    %v1632 = vld [vmem:[#allocation3 + $0x28] sm:$0xff]
    %v1633 = vld [vmem:[#allocation3 + $0x30] sm:$0xff]
    %v1634 = vld [vmem:[#allocation3 + $0x38] sm:$0xff]
    %v1635 = vld [vmem:[%s5] sm:$0xff]
    %v1636 = vld [vmem:[%s5 + $0x8] sm:$0xff]
    %v1637 = vld [vmem:[%s5 + $0x10] sm:$0xff]
    %v1638 = vld [vmem:[%s5 + $0x18] sm:$0xff]
    %v1639 = vstv %s51
    %v1641 = vsel %vm66, %v1627, 0
    %v1644 = vsel %vm66, %v1628, 0
    %v1647 = vsel %vm66, %v1629, 0
    %v1650 = vsel %vm66, %v1630, 0
    %v1653 = vsel %vm66, %v1631, 0
    %v1656 = vsel %vm66, %v1632, 0
    %v1659 = vsel %vm66, %v1633, 0
    %v1662 = vsel %vm66, %v1634, 0
    %1664 = vmatprep.subr.mxu0 0.0
    %1665 = vmatpush1.msra.mxu0 %v1635
    %1666 = vmatprep.subr.mxu0 0.0
    %1667 = vmatpush1.msra.mxu0 %v1636
    %1668 = vmatprep.subr.mxu0 0.0
    %1669 = vmatpush1.msra.mxu0 %v1637
    %1670 = vmatprep.subr.mxu0 0.0
    %1671 = vmatpush1.msra.mxu0 %v1638
    %1672 = vmatprep.subr.mxu0 0.0
    %1673 = vmatpush1.msra.mxu0 0.0
    %1674 = vmatprep.subr.mxu0 0.0
    %1675 = vmatpush1.msra.mxu0 0.0
    %1676 = vmatprep.subr.mxu0 0.0
    %1677 = vmatpush1.msra.mxu0 0.0
    %1678 = vmatprep.subr.mxu0 0.0
    %1679 = vmatpush1.msra.mxu0 0.0
    %1680 = vmatprep.subr.mxu0 0.0
    %1681 = vmatpush1.msra.mxu0 0.0
    %1682 = vmatprep.subr.mxu0 0.0
    %1683 = vmatpush1.msra.mxu0 0.0
    %1684 = vmatprep.subr.mxu0 0.0
    %1685 = vmatpush1.msra.mxu0 0.0
    %1686 = vmatprep.subr.mxu0 0.0
    %1687 = vmatpush1.msra.mxu0 0.0
    %1688 = vmatprep.subr.mxu0 0.0
    %1689 = vmatpush1.msra.mxu0 0.0
    %1690 = vmatprep.subr.mxu0 0.0
    %1691 = vmatpush1.msra.mxu0 0.0
    %1692 = vmatprep.subr.mxu0 0.0
    %1693 = vmatpush1.msra.mxu0 0.0
    %1694 = vmatprep.subr.mxu0 0.0
    %1695 = vmatpush1.msra.mxu0 0.0
    %1696 = vmatprep.subr.mxu0 0.0
    %1697 = vmatpush1.msra.mxu0 0.0
    %1698 = vmatprep.subr.mxu0 0.0
    %1699 = vmatpush1.msra.mxu0 0.0
    %1700 = vmatprep.subr.mxu0 0.0
    %1701 = vmatpush1.msra.mxu0 0.0
    %1702 = vmatprep.subr.mxu0 0.0
    %1703 = vmatpush1.msra.mxu0 0.0
    %1704 = vmatprep.subr.mxu0 0.0
    %1705 = vmatpush1.msra.mxu0 0.0
    %1706 = vmatprep.subr.mxu0 0.0
    %1707 = vmatpush1.msra.mxu0 0.0
    %1708 = vmatprep.subr.mxu0 0.0
    %1709 = vmatpush1.msra.mxu0 0.0
    %1710 = vmatprep.subr.mxu0 0.0
    %1711 = vmatpush1.msra.mxu0 0.0
    %1712 = vmatprep.subr.mxu0 0.0
    %1713 = vmatpush1.msra.mxu0 0.0
    %1714 = vmatprep.subr.mxu0 0.0
    %1715 = vmatpush1.msra.mxu0 0.0
    %1716 = vmatprep.subr.mxu0 0.0
    %1717 = vmatpush1.msra.mxu0 0.0
    %1718 = vmatprep.subr.mxu0 0.0
    %1719 = vmatpush1.msra.mxu0 0.0
    %1720 = vmatprep.subr.mxu0 0.0
    %1721 = vmatpush1.msra.mxu0 0.0
    %1722 = vmatprep.subr.mxu0 0.0
    %1723 = vmatpush1.msra.mxu0 0.0
    %1724 = vmatprep.subr.mxu0 0.0
    %1725 = vmatpush1.msra.mxu0 0.0
    %1726 = vmatprep.subr.mxu0 0.0
    %1727 = vmatpush1.msra.mxu0 0.0
    %1728 = vmatprep.mubr.f32.mxu0 0.0
    %1729 = vmatmul.mubr.f32.gmra.mrb[0].mxu0 %v1641
    %v1730 = vpop.f32.mrb[0].mxu0
    %v1731 = vadd.f32 %v1639, %v1730
    %v1732 = vpop.f32.mrb[0].mxu0
    %1733 = vmatprep.mubr.f32.mxu0 0.0
    %1734 = vmatmul.mubr.f32.gmra.mrb[0].mxu0 %v1644
    %v1735 = vpop.f32.mrb[0].mxu0
    %v1736 = vadd.f32 %v1639, %v1735
    %v1737 = vpop.f32.mrb[0].mxu0
    %1738 = vmatprep.mubr.f32.mxu0 0.0
    %1739 = vmatmul.mubr.f32.gmra.mrb[0].mxu0 %v1647
    %v1740 = vpop.f32.mrb[0].mxu0
    %v1741 = vadd.f32 %v1639, %v1740
    %v1742 = vpop.f32.mrb[0].mxu0
    %1743 = vmatprep.mubr.f32.mxu0 0.0
    %1744 = vmatmul.mubr.f32.gmra.mrb[0].mxu0 %v1650
    %v1745 = vpop.f32.mrb[0].mxu0
    %v1746 = vadd.f32 %v1639, %v1745
    %v1747 = vpop.f32.mrb[0].mxu0
    %1748 = vmatprep.mubr.f32.mxu0 0.0
    %1749 = vmatmul.mubr.f32.gmra.mrb[0].mxu0 %v1653
    %v1750 = vpop.f32.mrb[0].mxu0
    %v1751 = vadd.f32 %v1639, %v1750
    %v1752 = vpop.f32.mrb[0].mxu0
    %1753 = vmatprep.mubr.f32.mxu0 0.0
    %1754 = vmatmul.mubr.f32.gmra.mrb[0].mxu0 %v1656
    %v1755 = vpop.f32.mrb[0].mxu0
    %v1756 = vadd.f32 %v1639, %v1755
    %v1757 = vpop.f32.mrb[0].mxu0
    %1758 = vmatprep.mubr.f32.mxu0 0.0
    %1759 = vmatmul.mubr.f32.gmra.mrb[0].mxu0 %v1659
    %v1760 = vpop.f32.mrb[0].mxu0
    %v1761 = vadd.f32 %v1639, %v1760
    %v1762 = vpop.f32.mrb[0].mxu0
    %1763 = vmatprep.mubr.f32.mxu0 0.0
    %1764 = vmatmul.mubr.f32.gmra.mrb[0].mxu0 %v1662
    %v1765 = vpop.f32.mrb[0].mxu0
    %v1766 = vadd.f32 %v1639, %v1765
    %v1767 = vpop.f32.mrb[0].mxu0
    %1768 = vdwg.mxu0
    %v1769 = vsel %vm307, %v1731, -inf
    %v1770 = vsel %vm307, %v1736, -inf
    %v1771 = vsel %vm307, %v1741, -inf
    %v1772 = vsel %vm307, %v1746, -inf
    %v1773 = vsel %vm307, %v1751, -inf
    %v1774 = vmax.f32 %v1769, %v1773
    %v1775 = vsel %vm307, %v1756, -inf
    %v1776 = vmax.f32 %v1770, %v1775
    %v1777 = vsel %vm307, %v1761, -inf
    %v1778 = vmax.f32 %v1771, %v1777
    %v1779 = vsel %vm307, %v1766, -inf
    %v1780 = vmax.f32 %v1772, %v1779
    %v1781 = vmax.f32 %v1774, %v1776
    %v1782 = vmax.f32 %v1778, %v1780
    %v1783 = vmax.f32 %v1781, %v1782
    %v1784 = vsub.f32 %v1731, %v1783
    %v1785 = vsub.f32 %v1736, %v1783
    %v1786 = vsub.f32 %v1741, %v1783
    %v1787 = vsub.f32 %v1746, %v1783
    %v1788 = vsub.f32 %v1751, %v1783
    %v1789 = vsub.f32 %v1756, %v1783
    %v1790 = vsub.f32 %v1761, %v1783
    %v1791 = vsub.f32 %v1766, %v1783
    %v1792 = vmul.f32 %v1784, 1.442695
    %v1793 = vpow.pop %v1792
    %v1794 = vmul.f32 %v1785, 1.442695
    %v1795 = vpow.pop %v1794
    %v1796 = vmul.f32 %v1786, 1.442695
    %v1797 = vpow.pop %v1796
    %v1798 = vmul.f32 %v1787, 1.442695
    %v1799 = vpow.pop %v1798
    %v1800 = vmul.f32 %v1788, 1.442695
    %v1801 = vpow.pop %v1800
    %v1802 = vmul.f32 %v1789, 1.442695
    %v1803 = vpow.pop %v1802
    %v1804 = vmul.f32 %v1790, 1.442695
    %v1805 = vpow.pop %v1804
    %v1806 = vmul.f32 %v1791, 1.442695
    %v1807 = vpow.pop %v1806
    %v1808 = vsel %vm307, %v1793, 0.0
    %v1809 = vsel %vm307, %v1795, 0.0
    %v1810 = vadd.f32 %v1808, %v1809
    %v1811 = vsel %vm307, %v1797, 0.0
    %v1812 = vadd.f32 %v1810, %v1811
    %v1813 = vsel %vm307, %v1799, 0.0
    %v1814 = vadd.f32 %v1812, %v1813
    %v1815 = vsel %vm307, %v1801, 0.0
    %v1816 = vadd.f32 %v1814, %v1815
    %v1817 = vsel %vm307, %v1803, 0.0
    %v1818 = vadd.f32 %v1816, %v1817
    %v1819 = vsel %vm307, %v1805, 0.0
    %v1820 = vadd.f32 %v1818, %v1819
    %v1821 = vsel %vm307, %v1807, 0.0
    %v1822 = vadd.f32 %v1820, %v1821
    %v1823 = vrcp.pop %v1822
    %v1824 = vmul.f32 %v1793, %v1823
    %v1825 = vmul.f32 %v1795, %v1823
    %v1826 = vmul.f32 %v1797, %v1823
    %v1827 = vmul.f32 %v1799, %v1823
    %v1828 = vmul.f32 %v1801, %v1823
    %v1829 = vmul.f32 %v1803, %v1823
    %v1830 = vmul.f32 %v1805, %v1823
    %v1831 = vmul.f32 %v1807, %v1823
    %1833 = vset.pattern.permute.xlu0 0
    %1834 = vperm.xlu0 %1833, %v1824
    %v1835 = vpop.permute.xlu0 %1834
    %1838 = vset.pattern.permute.xlu0 0
    %1839 = vperm.xlu0 %1838, %v1825
    %v1840 = vpop.permute.xlu0 %1839
    %1843 = vset.pattern.permute.xlu0 0
    %1844 = vperm.xlu0 %1843, %v1826
    %v1845 = vpop.permute.xlu0 %1844
    %1848 = vset.pattern.permute.xlu0 0
    %1849 = vperm.xlu0 %1848, %v1827
    %v1850 = vpop.permute.xlu0 %1849
    %1853 = vset.pattern.permute.xlu0 0
    %1854 = vperm.xlu0 %1853, %v1828
    %v1855 = vpop.permute.xlu0 %1854
    %1858 = vset.pattern.permute.xlu0 0
    %1859 = vperm.xlu0 %1858, %v1829
    %v1860 = vpop.permute.xlu0 %1859
    %1863 = vset.pattern.permute.xlu0 0
    %1864 = vperm.xlu0 %1863, %v1830
    %v1865 = vpop.permute.xlu0 %1864
    %1868 = vset.pattern.permute.xlu0 0
    %1869 = vperm.xlu0 %1868, %v1831
    %v1870 = vpop.permute.xlu0 %1869
    %v1872 = vmul.f32 %v628, %v1835
    %v1873 = vmul.f32 %v629, %v1840
    %v1874 = vmul.f32 %v630, %v1845
    %v1875 = vmul.f32 %v631, %v1850
    %v1876 = vmul.f32 %v632, %v1855
    %v1877 = vmul.f32 %v633, %v1860
    %v1878 = vmul.f32 %v634, %v1865
    %v1879 = vmul.f32 %v635, %v1870
    %v1880 = vsel %vm66, %v1872, 0.0
    %v1881 = vsel %vm66, %v1873, 0.0
    %v1882 = vadd.f32 %v1880, %v1881
    %v1883 = vsel %vm66, %v1874, 0.0
    %v1884 = vadd.f32 %v1882, %v1883
    %v1885 = vsel %vm66, %v1875, 0.0
    %v1886 = vadd.f32 %v1884, %v1885
    %v1887 = vsel %vm66, %v1876, 0.0
    %v1888 = vadd.f32 %v1886, %v1887
    %v1889 = vsel %vm66, %v1877, 0.0
    %v1890 = vadd.f32 %v1888, %v1889
    %v1891 = vsel %vm66, %v1878, 0.0
    %v1892 = vadd.f32 %v1890, %v1891
    %v1893 = vsel %vm66, %v1879, 0.0
    %v1894 = vadd.f32 %v1892, %v1893
    %v1895 = vld [vmem:[%s6] sm:$0xff]
    %v1896 = vld [vmem:[%s6 + $0x8] sm:$0xff]
    %v1897 = vld [vmem:[%s6 + $0x10] sm:$0xff]
    %v1898 = vld [vmem:[%s6 + $0x18] sm:$0xff]
    %1899 = vmatprep.subr.mxu0 0.0
    %1900 = vmatpush1.msra.mxu0 %v1895
    %1901 = vmatprep.subr.mxu0 0.0
    %1902 = vmatpush1.msra.mxu0 %v1896
    %1903 = vmatprep.subr.mxu0 0.0
    %1904 = vmatpush1.msra.mxu0 %v1897
    %1905 = vmatprep.subr.mxu0 0.0
    %1906 = vmatpush1.msra.mxu0 %v1898
    %1907 = vmatprep.subr.mxu0 0.0
    %1908 = vmatpush1.msra.mxu0 0.0
    %1909 = vmatprep.subr.mxu0 0.0
    %1910 = vmatpush1.msra.mxu0 0.0
    %1911 = vmatprep.subr.mxu0 0.0
    %1912 = vmatpush1.msra.mxu0 0.0
    %1913 = vmatprep.subr.mxu0 0.0
    %1914 = vmatpush1.msra.mxu0 0.0
    %1915 = vmatprep.subr.mxu0 0.0
    %1916 = vmatpush1.msra.mxu0 0.0
    %1917 = vmatprep.subr.mxu0 0.0
    %1918 = vmatpush1.msra.mxu0 0.0
    %1919 = vmatprep.subr.mxu0 0.0
    %1920 = vmatpush1.msra.mxu0 0.0
    %1921 = vmatprep.subr.mxu0 0.0
    %1922 = vmatpush1.msra.mxu0 0.0
    %1923 = vmatprep.subr.mxu0 0.0
    %1924 = vmatpush1.msra.mxu0 0.0
    %1925 = vmatprep.subr.mxu0 0.0
    %1926 = vmatpush1.msra.mxu0 0.0
    %1927 = vmatprep.subr.mxu0 0.0
    %1928 = vmatpush1.msra.mxu0 0.0
    %1929 = vmatprep.subr.mxu0 0.0
    %1930 = vmatpush1.msra.mxu0 0.0
    %1931 = vmatprep.subr.mxu0 0.0
    %1932 = vmatpush1.msra.mxu0 0.0
    %1933 = vmatprep.subr.mxu0 0.0
    %1934 = vmatpush1.msra.mxu0 0.0
    %1935 = vmatprep.subr.mxu0 0.0
    %1936 = vmatpush1.msra.mxu0 0.0
    %1937 = vmatprep.subr.mxu0 0.0
    %1938 = vmatpush1.msra.mxu0 0.0
    %1939 = vmatprep.subr.mxu0 0.0
    %1940 = vmatpush1.msra.mxu0 0.0
    %1941 = vmatprep.subr.mxu0 0.0
    %1942 = vmatpush1.msra.mxu0 0.0
    %1943 = vmatprep.subr.mxu0 0.0
    %1944 = vmatpush1.msra.mxu0 0.0
    %1945 = vmatprep.subr.mxu0 0.0
    %1946 = vmatpush1.msra.mxu0 0.0
    %1947 = vmatprep.subr.mxu0 0.0
    %1948 = vmatpush1.msra.mxu0 0.0
    %1949 = vmatprep.subr.mxu0 0.0
    %1950 = vmatpush1.msra.mxu0 0.0
    %1951 = vmatprep.subr.mxu0 0.0
    %1952 = vmatpush1.msra.mxu0 0.0
    %1953 = vmatprep.subr.mxu0 0.0
    %1954 = vmatpush1.msra.mxu0 0.0
    %1955 = vmatprep.subr.mxu0 0.0
    %1956 = vmatpush1.msra.mxu0 0.0
    %1957 = vmatprep.subr.mxu0 0.0
    %1958 = vmatpush1.msra.mxu0 0.0
    %1959 = vmatprep.subr.mxu0 0.0
    %1960 = vmatpush1.msra.mxu0 0.0
    %1961 = vmatprep.subr.mxu0 0.0
    %1962 = vmatpush1.msra.mxu0 0.0
    %1963 = vmatprep.mubr.f32.mxu0 0.0
    %1964 = vmatmul.mubr.f32.gmra.mrb[0].mxu0 %v648
    %v1965 = vpop.f32.mrb[0].mxu0
    %v1966 = vadd.f32 0.0, %v1965
    %v1967 = vpop.f32.mrb[0].mxu0
    %1968 = vmatprep.mubr.f32.mxu0 0.0
    %1969 = vmatmul.mubr.f32.gmra.mrb[0].mxu0 %v651
    %v1970 = vpop.f32.mrb[0].mxu0
    %v1971 = vadd.f32 0.0, %v1970
    %v1972 = vpop.f32.mrb[0].mxu0
    %1973 = vmatprep.mubr.f32.mxu0 0.0
    %1974 = vmatmul.mubr.f32.gmra.mrb[0].mxu0 %v654
    %v1975 = vpop.f32.mrb[0].mxu0
    %v1976 = vadd.f32 0.0, %v1975
    %v1977 = vpop.f32.mrb[0].mxu0
    %1978 = vmatprep.mubr.f32.mxu0 0.0
    %1979 = vmatmul.mubr.f32.gmra.mrb[0].mxu0 %v657
    %v1980 = vpop.f32.mrb[0].mxu0
    %v1981 = vadd.f32 0.0, %v1980
    %v1982 = vpop.f32.mrb[0].mxu0
    %1983 = vmatprep.mubr.f32.mxu0 0.0
    %1984 = vmatmul.mubr.f32.gmra.mrb[0].mxu0 %v660
    %v1985 = vpop.f32.mrb[0].mxu0
    %v1986 = vadd.f32 0.0, %v1985
    %v1987 = vpop.f32.mrb[0].mxu0
    %1988 = vmatprep.mubr.f32.mxu0 0.0
    %1989 = vmatmul.mubr.f32.gmra.mrb[0].mxu0 %v663
    %v1990 = vpop.f32.mrb[0].mxu0
    %v1991 = vadd.f32 0.0, %v1990
    %v1992 = vpop.f32.mrb[0].mxu0
    %1993 = vmatprep.mubr.f32.mxu0 0.0
    %1994 = vmatmul.mubr.f32.gmra.mrb[0].mxu0 %v666
    %v1995 = vpop.f32.mrb[0].mxu0
    %v1996 = vadd.f32 0.0, %v1995
    %v1997 = vpop.f32.mrb[0].mxu0
    %1998 = vmatprep.mubr.f32.mxu0 0.0
    %1999 = vmatmul.mubr.f32.gmra.mrb[0].mxu0 %v669
    %v2000 = vpop.f32.mrb[0].mxu0
    %v2001 = vadd.f32 0.0, %v2000
    %v2002 = vpop.f32.mrb[0].mxu0
    %2003 = vdwg.mxu0
    %v2004 = vld [vmem:[%s7] sm:$0xff]
    %v2005 = vld [vmem:[%s7 + $0x8] sm:$0xff]
    %v2006 = vld [vmem:[%s7 + $0x10] sm:$0xff]
    %v2007 = vld [vmem:[%s7 + $0x18] sm:$0xff]
    %v2009 = vsel %vm66, %v1894, 0
    %2011 = vmatprep.subr.mxu0 0.0
    %2012 = vmatpush1.msra.mxu0 %v2004
    %2013 = vmatprep.subr.mxu0 0.0
    %2014 = vmatpush1.msra.mxu0 %v2005
    %2015 = vmatprep.subr.mxu0 0.0
    %2016 = vmatpush1.msra.mxu0 %v2006
    %2017 = vmatprep.subr.mxu0 0.0
    %2018 = vmatpush1.msra.mxu0 %v2007
    %2019 = vmatprep.subr.mxu0 0.0
    %2020 = vmatpush1.msra.mxu0 0.0
    %2021 = vmatprep.subr.mxu0 0.0
    %2022 = vmatpush1.msra.mxu0 0.0
    %2023 = vmatprep.subr.mxu0 0.0
    %2024 = vmatpush1.msra.mxu0 0.0
    %2025 = vmatprep.subr.mxu0 0.0
    %2026 = vmatpush1.msra.mxu0 0.0
    %2027 = vmatprep.subr.mxu0 0.0
    %2028 = vmatpush1.msra.mxu0 0.0
    %2029 = vmatprep.subr.mxu0 0.0
    %2030 = vmatpush1.msra.mxu0 0.0
    %2031 = vmatprep.subr.mxu0 0.0
    %2032 = vmatpush1.msra.mxu0 0.0
    %2033 = vmatprep.subr.mxu0 0.0
    %2034 = vmatpush1.msra.mxu0 0.0
    %2035 = vmatprep.subr.mxu0 0.0
    %2036 = vmatpush1.msra.mxu0 0.0
    %2037 = vmatprep.subr.mxu0 0.0
    %2038 = vmatpush1.msra.mxu0 0.0
    %2039 = vmatprep.subr.mxu0 0.0
    %2040 = vmatpush1.msra.mxu0 0.0
    %2041 = vmatprep.subr.mxu0 0.0
    %2042 = vmatpush1.msra.mxu0 0.0
    %2043 = vmatprep.subr.mxu0 0.0
    %2044 = vmatpush1.msra.mxu0 0.0
    %2045 = vmatprep.subr.mxu0 0.0
    %2046 = vmatpush1.msra.mxu0 0.0
    %2047 = vmatprep.subr.mxu0 0.0
    %2048 = vmatpush1.msra.mxu0 0.0
    %2049 = vmatprep.subr.mxu0 0.0
    %2050 = vmatpush1.msra.mxu0 0.0
    %2051 = vmatprep.subr.mxu0 0.0
    %2052 = vmatpush1.msra.mxu0 0.0
    %2053 = vmatprep.subr.mxu0 0.0
    %2054 = vmatpush1.msra.mxu0 0.0
    %2055 = vmatprep.subr.mxu0 0.0
    %2056 = vmatpush1.msra.mxu0 0.0
    %2057 = vmatprep.subr.mxu0 0.0
    %2058 = vmatpush1.msra.mxu0 0.0
    %2059 = vmatprep.subr.mxu0 0.0
    %2060 = vmatpush1.msra.mxu0 0.0
    %2061 = vmatprep.subr.mxu0 0.0
    %2062 = vmatpush1.msra.mxu0 0.0
    %2063 = vmatprep.subr.mxu0 0.0
    %2064 = vmatpush1.msra.mxu0 0.0
    %2065 = vmatprep.subr.mxu0 0.0
    %2066 = vmatpush1.msra.mxu0 0.0
    %2067 = vmatprep.subr.mxu0 0.0
    %2068 = vmatpush1.msra.mxu0 0.0
    %2069 = vmatprep.subr.mxu0 0.0
    %2070 = vmatpush1.msra.mxu0 0.0
    %2071 = vmatprep.subr.mxu0 0.0
    %2072 = vmatpush1.msra.mxu0 0.0
    %2073 = vmatprep.subr.mxu0 0.0
    %2074 = vmatpush1.msra.mxu0 0.0
    %2075 = vmatprep.mubr.f32.mxu0 0.0
    %2076 = vmatmul.mubr.f32.gmra.mrb[0].mxu0 %v2009
    %v2077 = vpop.f32.mrb[0].mxu0
    %v2078 = vadd.f32 0.0, %v2077
    %v2079 = vpop.f32.mrb[0].mxu0
    %2080 = vdwg.mxu0
    %v2081 = vadd.f32 %v1966, %v2078
    %v2082 = vadd.f32 %v1971, %v2078
    %v2083 = vadd.f32 %v1976, %v2078
    %v2084 = vadd.f32 %v1981, %v2078
    %v2085 = vadd.f32 %v1986, %v2078
    %v2086 = vadd.f32 %v1991, %v2078
    %v2087 = vadd.f32 %v1996, %v2078
    %v2088 = vadd.f32 %v2001, %v2078
    %v2089 = vstv %s52
    %v2090 = vadd.f32 %v2081, %v2089
    %v2091 = vadd.f32 %v2082, %v2089
    %v2092 = vadd.f32 %v2083, %v2089
    %v2093 = vadd.f32 %v2084, %v2089
    %v2094 = vadd.f32 %v2085, %v2089
    %v2095 = vadd.f32 %v2086, %v2089
    %v2096 = vadd.f32 %v2087, %v2089
    %v2097 = vadd.f32 %v2088, %v2089
    %v2098 = vxor.u32 %v2090, 2147483648
    %v2099 = vxor.u32 %v2091, 2147483648
    %v2100 = vxor.u32 %v2092, 2147483648
    %v2101 = vxor.u32 %v2093, 2147483648
    %v2102 = vxor.u32 %v2094, 2147483648
    %v2103 = vxor.u32 %v2095, 2147483648
    %v2104 = vxor.u32 %v2096, 2147483648
    %v2105 = vxor.u32 %v2097, 2147483648
    %v2106 = vmul.f32 %v2098, 1.442695
    %v2107 = vpow.pop %v2106
    %v2108 = vmul.f32 %v2099, 1.442695
    %v2109 = vpow.pop %v2108
    %v2110 = vmul.f32 %v2100, 1.442695
    %v2111 = vpow.pop %v2110
    %v2112 = vmul.f32 %v2101, 1.442695
    %v2113 = vpow.pop %v2112
    %v2114 = vmul.f32 %v2102, 1.442695
    %v2115 = vpow.pop %v2114
    %v2116 = vmul.f32 %v2103, 1.442695
    %v2117 = vpow.pop %v2116
    %v2118 = vmul.f32 %v2104, 1.442695
    %v2119 = vpow.pop %v2118
    %v2120 = vmul.f32 %v2105, 1.442695
    %v2121 = vpow.pop %v2120
    %v2122 = vadd.f32 %v2107, 1.0
    %v2123 = vadd.f32 %v2109, 1.0
    %v2124 = vadd.f32 %v2111, 1.0
    %v2125 = vadd.f32 %v2113, 1.0
    %v2126 = vadd.f32 %v2115, 1.0
    %v2127 = vadd.f32 %v2117, 1.0
    %v2128 = vadd.f32 %v2119, 1.0
    %v2129 = vadd.f32 %v2121, 1.0
    %v2130 = vrcp.pop %v2122
    %v2131 = vmul.f32 1.0, %v2130
    %v2132 = vrcp.pop %v2123
    %v2133 = vmul.f32 1.0, %v2132
    %v2134 = vrcp.pop %v2124
    %v2135 = vmul.f32 1.0, %v2134
    %v2136 = vrcp.pop %v2125
    %v2137 = vmul.f32 1.0, %v2136
    %v2138 = vrcp.pop %v2126
    %v2139 = vmul.f32 1.0, %v2138
    %v2140 = vrcp.pop %v2127
    %v2141 = vmul.f32 1.0, %v2140
    %v2142 = vrcp.pop %v2128
    %v2143 = vmul.f32 1.0, %v2142
    %v2144 = vrcp.pop %v2129
    %v2145 = vmul.f32 1.0, %v2144
    %v2146 = vadd.f32 %v2131, %v2133
    %v2147 = vadd.f32 %v2146, %v2135
    %v2148 = vadd.f32 %v2147, %v2137
    %v2149 = vadd.f32 %v2148, %v2139
    %v2150 = vadd.f32 %v2149, %v2141
    %v2151 = vadd.f32 %v2150, %v2143
    %v2152 = vadd.f32 %v2151, %v2145
    %2154 = vset.pattern.permute.xlu0 0
    %2155 = vperm.xlu0 %2154, %v2131
    %v2156 = vpop.permute.xlu0 %2155
    %2159 = vset.pattern.permute.xlu0 0
    %2160 = vperm.xlu0 %2159, %v2146
    %v2161 = vpop.permute.xlu0 %2160
    %2164 = vset.pattern.permute.xlu0 0
    %2165 = vperm.xlu0 %2164, %v2147
    %v2166 = vpop.permute.xlu0 %2165
    %2169 = vset.pattern.permute.xlu0 0
    %2170 = vperm.xlu0 %2169, %v2148
    %v2171 = vpop.permute.xlu0 %2170
    %2174 = vset.pattern.permute.xlu0 0
    %2175 = vperm.xlu0 %2174, %v2149
    %v2176 = vpop.permute.xlu0 %2175
    %2179 = vset.pattern.permute.xlu0 0
    %2180 = vperm.xlu0 %2179, %v2150
    %v2181 = vpop.permute.xlu0 %2180
    %2184 = vset.pattern.permute.xlu0 0
    %2185 = vperm.xlu0 %2184, %v2151
    %v2186 = vpop.permute.xlu0 %2185
    %2189 = vset.pattern.permute.xlu0 0
    %2190 = vperm.xlu0 %2189, %v2152
    %v2191 = vpop.permute.xlu0 %2190
    %v2193 = vmul.f32 %v1627, %v2156
    %v2194 = vmul.f32 %v1628, %v2161
    %v2195 = vmul.f32 %v1629, %v2166
    %v2196 = vmul.f32 %v1630, %v2171
    %v2197 = vmul.f32 %v1631, %v2176
    %v2198 = vmul.f32 %v1632, %v2181
    %v2199 = vmul.f32 %v1633, %v2186
    %v2200 = vmul.f32 %v1634, %v2191
    %v2201 = vld [vmem:[%s11] sm:$0xff]
    %v2202 = vld [vmem:[%s11 + $0x8] sm:$0xff]
    %v2203 = vld [vmem:[%s11 + $0x10] sm:$0xff]
    %v2204 = vld [vmem:[%s11 + $0x18] sm:$0xff]
    %v2205 = vld [vmem:[%s12] sm:$0x1]
    %v2207 = vlaneseq
    %v2208 = vshrl.u32 %v2207, 7
    %v2209 = vsub.s32 0, %v2208
    %v2210 = vrot.slane %v2205, %v2209
    %v2213 = vsel %vm66, %v2193, 0
    %v2216 = vsel %vm66, %v2194, 0
    %v2219 = vsel %vm66, %v2195, 0
    %v2222 = vsel %vm66, %v2196, 0
    %v2225 = vsel %vm66, %v2197, 0
    %v2228 = vsel %vm66, %v2198, 0
    %v2231 = vsel %vm66, %v2199, 0
    %v2234 = vsel %vm66, %v2200, 0
    %2236 = vmatprep.subr.mxu0 0.0
    %2237 = vmatpush1.msra.mxu0 %v2201
    %2238 = vmatprep.subr.mxu0 0.0
    %2239 = vmatpush1.msra.mxu0 %v2202
    %2240 = vmatprep.subr.mxu0 0.0
    %2241 = vmatpush1.msra.mxu0 %v2203
    %2242 = vmatprep.subr.mxu0 0.0
    %2243 = vmatpush1.msra.mxu0 %v2204
    %2244 = vmatprep.subr.mxu0 0.0
    %2245 = vmatpush1.msra.mxu0 0.0
    %2246 = vmatprep.subr.mxu0 0.0
    %2247 = vmatpush1.msra.mxu0 0.0
    %2248 = vmatprep.subr.mxu0 0.0
    %2249 = vmatpush1.msra.mxu0 0.0
    %2250 = vmatprep.subr.mxu0 0.0
    %2251 = vmatpush1.msra.mxu0 0.0
    %2252 = vmatprep.subr.mxu0 0.0
    %2253 = vmatpush1.msra.mxu0 0.0
    %2254 = vmatprep.subr.mxu0 0.0
    %2255 = vmatpush1.msra.mxu0 0.0
    %2256 = vmatprep.subr.mxu0 0.0
    %2257 = vmatpush1.msra.mxu0 0.0
    %2258 = vmatprep.subr.mxu0 0.0
    %2259 = vmatpush1.msra.mxu0 0.0
    %2260 = vmatprep.subr.mxu0 0.0
    %2261 = vmatpush1.msra.mxu0 0.0
    %2262 = vmatprep.subr.mxu0 0.0
    %2263 = vmatpush1.msra.mxu0 0.0
    %2264 = vmatprep.subr.mxu0 0.0
    %2265 = vmatpush1.msra.mxu0 0.0
    %2266 = vmatprep.subr.mxu0 0.0
    %2267 = vmatpush1.msra.mxu0 0.0
    %2268 = vmatprep.subr.mxu0 0.0
    %2269 = vmatpush1.msra.mxu0 0.0
    %2270 = vmatprep.subr.mxu0 0.0
    %2271 = vmatpush1.msra.mxu0 0.0
    %2272 = vmatprep.subr.mxu0 0.0
    %2273 = vmatpush1.msra.mxu0 0.0
    %2274 = vmatprep.subr.mxu0 0.0
    %2275 = vmatpush1.msra.mxu0 0.0
    %2276 = vmatprep.subr.mxu0 0.0
    %2277 = vmatpush1.msra.mxu0 0.0
    %2278 = vmatprep.subr.mxu0 0.0
    %2279 = vmatpush1.msra.mxu0 0.0
    %2280 = vmatprep.subr.mxu0 0.0
    %2281 = vmatpush1.msra.mxu0 0.0
    %2282 = vmatprep.subr.mxu0 0.0
    %2283 = vmatpush1.msra.mxu0 0.0
    %2284 = vmatprep.subr.mxu0 0.0
    %2285 = vmatpush1.msra.mxu0 0.0
    %2286 = vmatprep.subr.mxu0 0.0
    %2287 = vmatpush1.msra.mxu0 0.0
    %2288 = vmatprep.subr.mxu0 0.0
    %2289 = vmatpush1.msra.mxu0 0.0
    %2290 = vmatprep.subr.mxu0 0.0
    %2291 = vmatpush1.msra.mxu0 0.0
    %2292 = vmatprep.subr.mxu0 0.0
    %2293 = vmatpush1.msra.mxu0 0.0
    %2294 = vmatprep.subr.mxu0 0.0
    %2295 = vmatpush1.msra.mxu0 0.0
    %2296 = vmatprep.subr.mxu0 0.0
    %2297 = vmatpush1.msra.mxu0 0.0
    %2298 = vmatprep.subr.mxu0 0.0
    %2299 = vmatpush1.msra.mxu0 0.0
    %2300 = vmatprep.mubr.f32.mxu0 0.0
    %2301 = vmatmul.mubr.f32.gmra.mrb[0].mxu0 %v2213
    %v2302 = vpop.f32.mrb[0].mxu0
    %v2303 = vadd.f32 %v2210, %v2302
    %v2304 = vpop.f32.mrb[0].mxu0
    %2305 = vmatprep.mubr.f32.mxu0 0.0
    %2306 = vmatmul.mubr.f32.gmra.mrb[0].mxu0 %v2216
    %v2307 = vpop.f32.mrb[0].mxu0
    %v2308 = vadd.f32 %v2210, %v2307
    %v2309 = vpop.f32.mrb[0].mxu0
    %2310 = vmatprep.mubr.f32.mxu0 0.0
    %2311 = vmatmul.mubr.f32.gmra.mrb[0].mxu0 %v2219
    %v2312 = vpop.f32.mrb[0].mxu0
    %v2313 = vadd.f32 %v2210, %v2312
    %v2314 = vpop.f32.mrb[0].mxu0
    %2315 = vmatprep.mubr.f32.mxu0 0.0
    %2316 = vmatmul.mubr.f32.gmra.mrb[0].mxu0 %v2222
    %v2317 = vpop.f32.mrb[0].mxu0
    %v2318 = vadd.f32 %v2210, %v2317
    %v2319 = vpop.f32.mrb[0].mxu0
    %2320 = vmatprep.mubr.f32.mxu0 0.0
    %2321 = vmatmul.mubr.f32.gmra.mrb[0].mxu0 %v2225
    %v2322 = vpop.f32.mrb[0].mxu0
    %v2323 = vadd.f32 %v2210, %v2322
    %v2324 = vpop.f32.mrb[0].mxu0
    %2325 = vmatprep.mubr.f32.mxu0 0.0
    %2326 = vmatmul.mubr.f32.gmra.mrb[0].mxu0 %v2228
    %v2327 = vpop.f32.mrb[0].mxu0
    %v2328 = vadd.f32 %v2210, %v2327
    %v2329 = vpop.f32.mrb[0].mxu0
    %2330 = vmatprep.mubr.f32.mxu0 0.0
    %2331 = vmatmul.mubr.f32.gmra.mrb[0].mxu0 %v2231
    %v2332 = vpop.f32.mrb[0].mxu0
    %v2333 = vadd.f32 %v2210, %v2332
    %v2334 = vpop.f32.mrb[0].mxu0
    %2335 = vmatprep.mubr.f32.mxu0 0.0
    %2336 = vmatmul.mubr.f32.gmra.mrb[0].mxu0 %v2234
    %v2337 = vpop.f32.mrb[0].mxu0
    %v2338 = vadd.f32 %v2210, %v2337
    %v2339 = vpop.f32.mrb[0].mxu0
    %2340 = vdwg.mxu0
    %2341 = vst [vmem:[#allocation6] sm:$0xff] %v2303
    %2342 = vst [vmem:[#allocation6 + $0x8] sm:$0xff] %v2308
    %2343 = vst [vmem:[#allocation6 + $0x10] sm:$0xff] %v2313
    %2344 = vst [vmem:[#allocation6 + $0x18] sm:$0xff] %v2318
    %2345 = vst [vmem:[#allocation6 + $0x20] sm:$0xff] %v2323
    %2346 = vst [vmem:[#allocation6 + $0x28] sm:$0xff] %v2328
    %2347 = vst [vmem:[#allocation6 + $0x30] sm:$0xff] %v2333
    %2348 = vst [vmem:[#allocation6 + $0x38] sm:$0xff] %v2338
    // Predicated region
    $region50: #{tpu_custom_call.1} parent=1 // pred_check
      _
    $region51: #{tpu_custom_call.1} parent=1 // pred_check_branch
      %2350 = sbr.rel (0) target = $region53
    $region52: #{tpu_custom_call.1} parent=1 // pred_region
      %s2352 = ssub.s32 1024, 1024
      %2353 = vsyncadd [#allocation7], %s2352
      %s2354 = sshll.u32 [#allocation6], 4
      %s2355 = int_to_ptr.vmem [resolvable:$true] %s2354
      %2360 = dma.vmem_to_hbm [thread:$0]  %s2355, 1024, %s13, [#allocation7], 128, 128, 8
    $region53: #{tpu_custom_call.1} parent=1 // pred_fallthru
      _
    // Predicated region
    $region54: #{tpu_custom_call.1} parent=1 // pred_check
      _
    $region55: #{tpu_custom_call.1} parent=1 // pred_check_branch
      %2362 = sbr.rel (0) target = $region57
    $region56: #{tpu_custom_call.1} parent=1 // pred_region
      %2363 = dma.done [#allocation7], 1024
    $region57: #{tpu_custom_call.1} parent=1 // pred_fallthru
      _
    %2364 = vsyncpa [#allocation7], 1

</llo_original>
